<compile_context>
chip_gen: v6e
topology: v6e:2x2x1
jax: 0.10.0
libtpu: 0.0.40
codegen_flags: <defaults>
</compile_context>

<pallas_src>
import functools

import jax
import jax.numpy as jnp
from jax import lax
from jax.experimental import pallas as pl
from jax.experimental.pallas import tpu as pltpu


def _nlm_kernel(scale, c,
                qi_tbl, ki_tbl,                          # scalar prefetch (SMEM)
                qf_ref, kf_ref, qn_ref, knT_ref,         # inputs
                yqT_ref, ykT_ref,
                o_ref,                                   # output
                acc_ref, mask_ref):                      # scratch
    """One (batch, tile-pair) grid step of NLM over a triangular schedule.

    qf_ref/kf_ref : (1, T, Dp)     bf16 patch features of the two tiles
    qn_ref        : (1, T, 1)      f32 squared patch norms (query side)
    knT_ref       : (1, 1, T)      f32 squared patch norms (key side, transposed)
    yqT_ref/ykT_ref : (1, CPAD, T) bf16 pixel values, channel-major, with a
                                   ones row (row c) and zero rows to CPAD
    o_ref         : (1, NT, CPAD, T) f32 output (written once, last pair)
    acc_ref       : (NT, CPAD, T)  running [weighted pixel sums | density sum]
    mask_ref      : (T, T)         f32 0/1 self-pixel mask (0 on the diagonal)
    """
    t = pl.program_id(1)
    qi = qi_tbl[t]
    ki = ki_tbl[t]
    tile = qf_ref.shape[1]

    @pl.when(t == 0)
    def _init():
        acc_ref[...] = jnp.zeros_like(acc_ref)
        r = lax.broadcasted_iota(jnp.int32, (tile, tile), 0)
        s = lax.broadcasted_iota(jnp.int32, (tile, tile), 1)
        mask_ref[...] = jnp.where(r == s, 0.0, 1.0).astype(mask_ref.dtype)

    qf = qf_ref[0]                        # (T, Dp) bf16
    kf = kf_ref[0]                        # (T, Dp) bf16
    qn = qn_ref[0]                        # (T, 1)  f32
    kn = knT_ref[0]                       # (1, T)  f32

    # Euclidean distance: ||q||^2 + ||k||^2 - 2 q.k^T (MXU for the cross term;
    # norms were computed from the f32 features in the wrapper).
    qk = lax.dot_general(qf, kf, (((1,), (1,)), ((), ())),
                         preferred_element_type=jnp.float32)      # (Tq, Tk)
    d2 = jnp.maximum(qn + kn - 2.0 * qk, 0.0)
    density = jnp.exp(-jnp.sqrt(d2) * scale)                      # (Tq, Tk) f32

    ykT = ykT_ref[0]                      # (CPAD, Tk) bf16
    yqT = yqT_ref[0]                      # (CPAD, Tq) bf16

    @pl.when(qi == ki)
    def _diagonal():
        # Self-pixel gets zero weight (diag_embed(+inf) in the reference).
        dens = (density * mask_ref[...]).astype(jnp.bfloat16)
        acc_ref[qi] += lax.dot_general(ykT, dens, (((1,), (1,)), ((), ())),
                                       preferred_element_type=jnp.float32)

    @pl.when(qi != ki)
    def _off_diagonal():
        dens = density.astype(jnp.bfloat16)
        # Keys in tile ki -> queries in tile qi:  (CPAD, Tq) += ykT . dens^T
        acc_ref[qi] += lax.dot_general(ykT, dens, (((1,), (1,)), ((), ())),
                                       preferred_element_type=jnp.float32)
        # Symmetric contribution (D symmetric): (CPAD, Tk) += yqT . dens
        acc_ref[ki] += lax.dot_general(yqT, dens, (((1,), (0,)), ((), ())),
                                       preferred_element_type=jnp.float32)

    @pl.when(t == pl.num_programs(1) - 1)
    def _finalize():
        acc = acc_ref[...]                           # (NT, CPAD, T)
        den = acc[:, c:c + 1, :]                     # (NT, 1, T) density row sums
        o_ref[0] = (acc / den).astype(o_ref.dtype)


def _extract_patch_features(image, patch_size):
    """F.unfold(F.pad(image, replicate), P) with the center pixel removed.

    Returns (yN, y):
      yN : (b, N, c*(P*P-1))  patch neighborhoods per pixel (f32)
      y  : (b, N, c)          raw pixel values per pixel (f32)
    """
    b, c, h, w = image.shape
    p = patch_size
    pp = p // 2
    n = h * w

    padded = jnp.pad(image, ((0, 0), (0, 0), (pp, pp), (pp, pp)), mode="edge")
    offsets = [padded[:, :, dy:dy + h, dx:dx + w]
               for dy in range(p) for dx in range(p)]
    patches = jnp.stack(offsets, axis=2)                 # (b, c, P*P, h, w)
    center = (p * p) // 2
    keep = [i for i in range(p * p) if i != center]
    patches = patches[:, :, keep, :, :]                  # (b, c, P*P-1, h, w)

    yN = patches.reshape(b, c * (p * p - 1), n).transpose(0, 2, 1)   # (b, N, D)
    y = image.reshape(b, c, n).transpose(0, 2, 1)                    # (b, N, C)
    return yN, y


def _pick_tile(n, tile_n):
    """Largest divisor of n that is <= tile_n and lane-friendly (128 mult)."""
    for t in range(min(tile_n, n), 0, -1):
        if n % t == 0 and (t % 128 == 0 or t == n):
            return t
    return n


def nlm_pallas(image, sigma, patch_size=5, H=1.0, tile_n=512):
    """Pallas implementation of nlm(image, sigma, patch_size, H)."""
    b, c, h, w = image.shape
    n = h * w
    img32 = image.astype(jnp.float32)

    yN, _ = _extract_patch_features(img32, patch_size)             # (b, N, D)

    # Squared patch norms in f32 (before any precision reduction).
    n2 = jnp.sum(yN * yN, axis=-1, keepdims=True)                  # (b, N, 1)
    n2_t = n2.transpose(0, 2, 1)                                   # (b, 1, N)

    # Zero-pad features to a lane multiple and cast to bf16 for the MXU.
    d = yN.shape[-1]
    d_pad = ((d + 127) // 128) * 128
    yN_b = jnp.pad(yN, ((0, 0), (0, 0), (0, d_pad - d))).astype(jnp.bfloat16)

    # Channel-major pixel values with an appended ones row (density row sums
    # come out of the same matmul) and zero rows padding to 8 sublanes.
    cpad = max(8, ((c + 1 + 7) // 8) * 8)
    y_flat = img32.reshape(b, c, n)
    y_augT = jnp.concatenate(
        [y_flat,
         jnp.ones((b, 1, n), jnp.float32),
         jnp.zeros((b, cpad - c - 1, n), jnp.float32)],
        axis=1).astype(jnp.bfloat16)                               # (b, CPAD, N)

    tile = _pick_tile(n, tile_n)
    nt = n // tile

    # Triangular tile-pair schedule (qi <= ki), qi-major so the query-side
    # blocks are revisited and not re-fetched on consecutive steps.
    pairs = [(qi, ki) for qi in range(nt) for ki in range(qi, nt)]
    qi_tbl = jnp.asarray([p[0] for p in pairs], dtype=jnp.int32)
    ki_tbl = jnp.asarray([p[1] for p in pairs], dtype=jnp.int32)
    n_pairs = len(pairs)

    # Reference uses float64; TPU computes in float32 (bf16 on the MXU).
    scale = 1.0 / (2.0 * (H ** 2) * (sigma ** 2))
    kernel = functools.partial(_nlm_kernel, scale, c)

    out = pl.pallas_call(
        kernel,
        out_shape=jax.ShapeDtypeStruct((b, nt, cpad, tile), jnp.float32),
        grid_spec=pltpu.PrefetchScalarGridSpec(
            num_scalar_prefetch=2,
            grid=(b, n_pairs),
            in_specs=[
                pl.BlockSpec((1, tile, d_pad),
                             lambda bi, t, qt, kt: (bi, qt[t], 0)),   # q feats
                pl.BlockSpec((1, tile, d_pad),
                             lambda bi, t, qt, kt: (bi, kt[t], 0)),   # k feats
                pl.BlockSpec((1, tile, 1),
                             lambda bi, t, qt, kt: (bi, qt[t], 0)),   # q norms
                pl.BlockSpec((1, 1, tile),
                             lambda bi, t, qt, kt: (bi, 0, kt[t])),   # k norms^T
                pl.BlockSpec((1, cpad, tile),
                             lambda bi, t, qt, kt: (bi, 0, qt[t])),   # y_q^T aug
                pl.BlockSpec((1, cpad, tile),
                             lambda bi, t, qt, kt: (bi, 0, kt[t])),   # y_k^T aug
            ],
            out_specs=pl.BlockSpec((1, nt, cpad, tile),
                                   lambda bi, t, qt, kt: (bi, 0, 0, 0)),
            scratch_shapes=[pltpu.VMEM((nt, cpad, tile), jnp.float32),
                            pltpu.VMEM((tile, tile), jnp.float32)],
        ),
        compiler_params=pltpu.CompilerParams(
            dimension_semantics=("parallel", "arbitrary")),
    )(qi_tbl, ki_tbl, yN_b, yN_b, n2, n2_t, y_augT, y_augT)

    # (b, NT, CPAD, T) -> keep channel rows -> (b, C, N) -> (b, C, h, w).
    out = out[:, :, :c, :]
    out = out.transpose(0, 2, 1, 3).reshape(b, c, n)   # no-op transpose if nt==1
    return out.reshape(b, c, h, w)


def nlm_module_forward(image, sigma, patch_size=5, patch_distance=32):
    """Equivalent of NLM(sigma, patch_size, patch_distance).forward(image)."""
    # TODO(synk): the `Tile` context manager is not provided in the reference
    # source; inputs here have spatial extent <= patch_distance so the whole
    # image is a single tile and fold_back is the identity.
    assert image.shape[-1] <= patch_distance and image.shape[-2] <= patch_distance
    H = (patch_size // 2) ** 0.5          # self.h in the PyTorch module
    return nlm_pallas(image, sigma, patch_size=patch_size, H=H)


def _nlm_reference_jax(image, sigma, patch_size=5, H=1.0):
    """Plain-JAX (float32) reference for correctness checking."""
    b, c, h, w = image.shape
    yN, y = _extract_patch_features(image.astype(jnp.float32), patch_size)
    diff = yN[:, :, None, :] - yN[:, None, :, :]
    dist = jnp.sqrt(jnp.sum(diff * diff, axis=-1))
    n = h * w
    eye = jnp.eye(n, dtype=bool)[None]
    dist = jnp.where(eye, jnp.inf, dist)
    density = jnp.exp(-dist / (2.0 * H ** 2 * sigma ** 2))
    weight = density / jnp.sum(density, axis=-1, keepdims=True)
    mmse = weight @ y                                   # (b, N, C)
    return mmse.transpose(0, 2, 1).reshape(b, c, h, w)


if __name__ == "__main__":
    key = jax.random.PRNGKey(0)
    b, c, h, w = 2, 3, 16, 16
    sigma = 1.0
    patch_size = 5
    patch_distance = 32

    image = jax.random.uniform(key, (b, c, h, w), dtype=jnp.float32)

    H = (patch_size // 2) ** 0.5
    ref = jax.block_until_ready(_nlm_reference_jax(image, sigma, patch_size, H))

    # Single-tile path (nt == 1, only the diagonal pair).
    out = nlm_module_forward(image, sigma, patch_size, patch_distance)
    out = jax.block_until_ready(out)
    assert out.shape == (b, c, h, w) and out.dtype == jnp.float32
    assert jnp.allclose(out, ref, rtol=2e-3, atol=2e-3), (
        float(jnp.max(jnp.abs(out - ref))))

    # Multi-tile path: exercises the symmetric off-diagonal accumulation.
    out2 = nlm_pallas(image, sigma, patch_size=patch_size, H=H, tile_n=128)
    out2 = jax.block_until_ready(out2)
    assert jnp.allclose(out2, ref, rtol=2e-3, atol=2e-3), (
        float(jnp.max(jnp.abs(out2 - ref))))

    print("KERNEL_OK")
</pallas_src>

<mosaic_0001>
module attributes {stable_mosaic.version = 11 : i64} {
  func.func @_nlm_kernel(%arg0: i32, %arg1: i32, %arg2: memref<1xi32, #tpu.memory_space<smem>>, %arg3: memref<1xi32, #tpu.memory_space<smem>>, %arg4: memref<1x256x128xbf16, #tpu.memory_space<vmem>>, %arg5: memref<1x256x128xbf16, #tpu.memory_space<vmem>>, %arg6: memref<1x256x1xf32, #tpu.memory_space<vmem>>, %arg7: memref<1x1x256xf32, #tpu.memory_space<vmem>>, %arg8: memref<1x8x256xbf16, #tpu.memory_space<vmem>>, %arg9: memref<1x8x256xbf16, #tpu.memory_space<vmem>>, %arg10: memref<1x1x8x256xf32, #tpu.memory_space<vmem>>, %arg11: memref<1x8x256xf32, #tpu.memory_space<vmem>>, %arg12: memref<256x256xf32, #tpu.memory_space<vmem>>) attributes {dimension_semantics = [#tpu.dimension_semantics<parallel>, #tpu.dimension_semantics<arbitrary>], iteration_bounds = array<i64: 2, 1>, scalar_prefetch = 2 : i64, scratch_operands = 2 : i64, tpu.core_type = #tpu.core_type<tc>, window_params = [{transform_indices = @transform_0, window_bounds = array<i64: 1, 256, 128>}, {transform_indices = @transform_1, window_bounds = array<i64: 1, 256, 128>}, {transform_indices = @transform_2, window_bounds = array<i64: 1, 256, 1>}, {transform_indices = @transform_3, window_bounds = array<i64: 1, 1, 256>}, {transform_indices = @transform_4, window_bounds = array<i64: 1, 8, 256>}, {transform_indices = @transform_5, window_bounds = array<i64: 1, 8, 256>}, {transform_indices = @transform_6, window_bounds = array<i64: 1, 1, 8, 256>}]} {
    %0 = arith.index_cast %arg1 : i32 to index
    %1 = memref.load %arg2[%0] : memref<1xi32, #tpu.memory_space<smem>>
    %2 = arith.index_cast %arg1 : i32 to index
    %3 = memref.load %arg3[%2] : memref<1xi32, #tpu.memory_space<smem>>
    %c0_i32 = arith.constant 0 : i32
    %4 = arith.cmpi eq, %arg1, %c0_i32 : i32
    %5 = arith.extui %4 : i1 to i32
    %c0_i32_0 = arith.constant 0 : i32
    %6 = arith.cmpi ne, %5, %c0_i32_0 : i32
    scf.if %6 {
      %cst_26 = arith.constant 0.000000e+00 : f32
      %43 = vector.broadcast %cst_26 : f32 to vector<1x8x256xf32>
      %c0_27 = arith.constant 0 : index
      %c0_28 = arith.constant 0 : index
      %c0_29 = arith.constant 0 : index
      %44 = vector.load %arg11[%c0_27, %c0_28, %c0_29] : memref<1x8x256xf32, #tpu.memory_space<vmem>>, vector<1x8x256xf32>
      tpu.vector_store %arg11[%c0_27, %c0_28, %c0_29], %43 {strides = array<i32>} : memref<1x8x256xf32, #tpu.memory_space<vmem>>, vector<1x8x256xf32>,
      %45 = tpu.iota {dimensions = array<i32: 0>} : vector<256x256xi32>
      %46 = tpu.iota {dimensions = array<i32: 1>} : vector<256x256xi32>
      %47 = arith.cmpi eq, %45, %46 : vector<256x256xi32>
      %cst_30 = arith.constant 0.000000e+00 : f32
      %cst_31 = arith.constant 1.000000e+00 : f32
      %48 = vector.broadcast %cst_30 : f32 to vector<256x256xf32>
      %49 = vector.broadcast %cst_31 : f32 to vector<256x256xf32>
      %50 = arith.select %47, %48, %49 : vector<256x256xi1>, vector<256x256xf32>
      %c0_32 = arith.constant 0 : index
      %c0_33 = arith.constant 0 : index
      %51 = vector.load %arg12[%c0_32, %c0_33] : memref<256x256xf32, #tpu.memory_space<vmem>>, vector<256x256xf32>
      tpu.vector_store %arg12[%c0_32, %c0_33], %50 {strides = array<i32>} : memref<256x256xf32, #tpu.memory_space<vmem>>, vector<256x256xf32>,
    } else {
    }
    %c0 = arith.constant 0 : index
    %c0_1 = arith.constant 0 : index
    %c0_2 = arith.constant 0 : index
    %7 = vector.load %arg4[%c0, %c0_1, %c0_2] : memref<1x256x128xbf16, #tpu.memory_space<vmem>>, vector<1x256x128xbf16>
    %8 = vector.shape_cast %7 : vector<1x256x128xbf16> to vector<256x128xbf16>
    %c0_3 = arith.constant 0 : index
    %c0_4 = arith.constant 0 : index
    %c0_5 = arith.constant 0 : index
    %9 = vector.load %arg5[%c0_3, %c0_4, %c0_5] : memref<1x256x128xbf16, #tpu.memory_space<vmem>>, vector<1x256x128xbf16>
    %10 = vector.shape_cast %9 : vector<1x256x128xbf16> to vector<256x128xbf16>
    %c0_6 = arith.constant 0 : index
    %c0_7 = arith.constant 0 : index
    %c0_8 = arith.constant 0 : index
    %11 = vector.load %arg6[%c0_6, %c0_7, %c0_8] : memref<1x256x1xf32, #tpu.memory_space<vmem>>, vector<1x256x1xf32>
    %12 = vector.shape_cast %11 : vector<1x256x1xf32> to vector<256x1xf32>
    %c0_9 = arith.constant 0 : index
    %c0_10 = arith.constant 0 : index
    %c0_11 = arith.constant 0 : index
    %13 = vector.load %arg7[%c0_9, %c0_10, %c0_11] : memref<1x1x256xf32, #tpu.memory_space<vmem>>, vector<1x1x256xf32>
    %14 = vector.shape_cast %13 : vector<1x1x256xf32> to vector<1x256xf32>
    %cst = arith.constant dense<0.000000e+00> : vector<256x256xf32>
    %15 = tpu.matmul %8, %10, %cst {dimension_numbers = #tpu.dot_dimension_numbers<[1], [1], [0], [0], [0, 0, 1, 0], [], []>} : vector<256x128xbf16>, vector<256x128xbf16>, vector<256x256xf32> -> vector<256x256xf32>
    %16 = vector.broadcast %12 : vector<256x1xf32> to vector<256x256xf32>
    %17 = vector.broadcast %14 : vector<1x256xf32> to vector<256x256xf32>
    %18 = arith.addf %16, %17 : vector<256x256xf32>
    %cst_12 = arith.constant 2.000000e+00 : f32
    %19 = vector.broadcast %cst_12 : f32 to vector<256x256xf32>
    %20 = arith.mulf %19, %15 : vector<256x256xf32>
    %21 = arith.subf %18, %20 : vector<256x256xf32>
    %cst_13 = arith.constant 0.000000e+00 : f32
    %22 = vector.broadcast %cst_13 : f32 to vector<256x256xf32>
    %23 = arith.maximumf %21, %22 : vector<256x256xf32>
    %24 = math.sqrt %23 : vector<256x256xf32>
    %cst_14 = arith.constant 0.000000e+00 : f32
    %25 = vector.broadcast %cst_14 : f32 to vector<256x256xf32>
    %26 = arith.subf %25, %24 : vector<256x256xf32>
    %cst_15 = arith.constant 2.500000e-01 : f32
    %27 = vector.broadcast %cst_15 : f32 to vector<256x256xf32>
    %28 = arith.mulf %26, %27 : vector<256x256xf32>
    %29 = math.exp %28 : vector<256x256xf32>
    %c0_16 = arith.constant 0 : index
    %c0_17 = arith.constant 0 : index
    %c0_18 = arith.constant 0 : index
    %30 = vector.load %arg9[%c0_16, %c0_17, %c0_18] : memref<1x8x256xbf16, #tpu.memory_space<vmem>>, vector<1x8x256xbf16>
    %31 = vector.shape_cast %30 : vector<1x8x256xbf16> to vector<8x256xbf16>
    %c0_19 = arith.constant 0 : index
    %c0_20 = arith.constant 0 : index
    %c0_21 = arith.constant 0 : index
    %32 = vector.load %arg8[%c0_19, %c0_20, %c0_21] : memref<1x8x256xbf16, #tpu.memory_space<vmem>>, vector<1x8x256xbf16>
    %33 = vector.shape_cast %32 : vector<1x8x256xbf16> to vector<8x256xbf16>
    %34 = arith.cmpi eq, %1, %3 : i32
    %35 = arith.extui %34 : i1 to i32
    %c0_i32_22 = arith.constant 0 : i32
    %36 = arith.cmpi ne, %35, %c0_i32_22 : i32
    scf.if %36 {
      %c0_26 = arith.constant 0 : index
      %c0_27 = arith.constant 0 : index
      %43 = vector.load %arg12[%c0_26, %c0_27] : memref<256x256xf32, #tpu.memory_space<vmem>>, vector<256x256xf32>
      %44 = arith.mulf %29, %43 : vector<256x256xf32>
      %45 = arith.truncf %44 : vector<256x256xf32> to vector<256x256xbf16>
      %46 = arith.index_cast %1 : i32 to index
      %c0_28 = arith.constant 0 : index
      %c0_29 = arith.constant 0 : index
      %47 = vector.load %arg11[%46, %c0_28, %c0_29] : memref<1x8x256xf32, #tpu.memory_space<vmem>>, vector<1x8x256xf32>
      %48 = vector.shape_cast %47 : vector<1x8x256xf32> to vector<8x256xf32>
      %cst_30 = arith.constant dense<0.000000e+00> : vector<8x256xf32>
      %49 = tpu.matmul %31, %45, %cst_30 {dimension_numbers = #tpu.dot_dimension_numbers<[1], [1], [0], [0], [0, 0, 1, 0], [], []>} : vector<8x256xbf16>, vector<256x256xbf16>, vector<8x256xf32> -> vector<8x256xf32>
      %50 = arith.addf %48, %49 : vector<8x256xf32>
      %51 = arith.index_cast %1 : i32 to index
      %c0_31 = arith.constant 0 : index
      %c0_32 = arith.constant 0 : index
      %52 = vector.load %arg11[%51, %c0_31, %c0_32] : memref<1x8x256xf32, #tpu.memory_space<vmem>>, vector<1x8x256xf32>
      %53 = vector.shape_cast %52 : vector<1x8x256xf32> to vector<8x256xf32>
      %54 = vector.shape_cast %50 : vector<8x256xf32> to vector<1x8x256xf32>
      tpu.vector_store %arg11[%51, %c0_31, %c0_32], %54 {strides = array<i32>} : memref<1x8x256xf32, #tpu.memory_space<vmem>>, vector<1x8x256xf32>,
    } else {
    }
    %37 = arith.cmpi ne, %1, %3 : i32
    %38 = arith.extui %37 : i1 to i32
    %c0_i32_23 = arith.constant 0 : i32
    %39 = arith.cmpi ne, %38, %c0_i32_23 : i32
    scf.if %39 {
      %43 = arith.truncf %29 : vector<256x256xf32> to vector<256x256xbf16>
      %44 = arith.index_cast %1 : i32 to index
      %c0_26 = arith.constant 0 : index
      %c0_27 = arith.constant 0 : index
      %45 = vector.load %arg11[%44, %c0_26, %c0_27] : memref<1x8x256xf32, #tpu.memory_space<vmem>>, vector<1x8x256xf32>
      %46 = vector.shape_cast %45 : vector<1x8x256xf32> to vector<8x256xf32>
      %cst_28 = arith.constant dense<0.000000e+00> : vector<8x256xf32>
      %47 = tpu.matmul %31, %43, %cst_28 {dimension_numbers = #tpu.dot_dimension_numbers<[1], [1], [0], [0], [0, 0, 1, 0], [], []>} : vector<8x256xbf16>, vector<256x256xbf16>, vector<8x256xf32> -> vector<8x256xf32>
      %48 = arith.addf %46, %47 : vector<8x256xf32>
      %49 = arith.index_cast %1 : i32 to index
      %c0_29 = arith.constant 0 : index
      %c0_30 = arith.constant 0 : index
      %50 = vector.load %arg11[%49, %c0_29, %c0_30] : memref<1x8x256xf32, #tpu.memory_space<vmem>>, vector<1x8x256xf32>
      %51 = vector.shape_cast %50 : vector<1x8x256xf32> to vector<8x256xf32>
      %52 = vector.shape_cast %48 : vector<8x256xf32> to vector<1x8x256xf32>
      tpu.vector_store %arg11[%49, %c0_29, %c0_30], %52 {strides = array<i32>} : memref<1x8x256xf32, #tpu.memory_space<vmem>>, vector<1x8x256xf32>,
      %53 = arith.index_cast %3 : i32 to index
      %c0_31 = arith.constant 0 : index
      %c0_32 = arith.constant 0 : index
      %54 = vector.load %arg11[%53, %c0_31, %c0_32] : memref<1x8x256xf32, #tpu.memory_space<vmem>>, vector<1x8x256xf32>
      %55 = vector.shape_cast %54 : vector<1x8x256xf32> to vector<8x256xf32>
      %cst_33 = arith.constant dense<0.000000e+00> : vector<8x256xf32>
      %56 = tpu.matmul %33, %43, %cst_33 {dimension_numbers = #tpu.dot_dimension_numbers<[1], [0], [0], [1], [0, 0, 1, 1], [], []>} : vector<8x256xbf16>, vector<256x256xbf16>, vector<8x256xf32> -> vector<8x256xf32>
      %57 = arith.addf %55, %56 : vector<8x256xf32>
      %58 = arith.index_cast %3 : i32 to index
      %c0_34 = arith.constant 0 : index
      %c0_35 = arith.constant 0 : index
      %59 = vector.load %arg11[%58, %c0_34, %c0_35] : memref<1x8x256xf32, #tpu.memory_space<vmem>>, vector<1x8x256xf32>
      %60 = vector.shape_cast %59 : vector<1x8x256xf32> to vector<8x256xf32>
      %61 = vector.shape_cast %57 : vector<8x256xf32> to vector<1x8x256xf32>
      tpu.vector_store %arg11[%58, %c0_34, %c0_35], %61 {strides = array<i32>} : memref<1x8x256xf32, #tpu.memory_space<vmem>>, vector<1x8x256xf32>,
    } else {
    }
    %c0_i32_24 = arith.constant 0 : i32
    %40 = arith.cmpi eq, %arg1, %c0_i32_24 : i32
    %41 = arith.extui %40 : i1 to i32
    %c0_i32_25 = arith.constant 0 : i32
    %42 = arith.cmpi ne, %41, %c0_i32_25 : i32
    scf.if %42 {
      %c0_26 = arith.constant 0 : index
      %c0_27 = arith.constant 0 : index
      %c0_28 = arith.constant 0 : index
      %43 = vector.load %arg11[%c0_26, %c0_27, %c0_28] : memref<1x8x256xf32, #tpu.memory_space<vmem>>, vector<1x8x256xf32>
      %44 = vector.extract_strided_slice %43 {offsets = [0, 3, 0], sizes = [1, 1, 256], strides = [1, 1, 1]} : vector<1x8x256xf32> to vector<1x1x256xf32>
      %45 = vector.broadcast %44 : vector<1x1x256xf32> to vector<1x8x256xf32>
      %46 = arith.divf %43, %45 : vector<1x8x256xf32>
      %c0_29 = arith.constant 0 : index
      %c0_30 = arith.constant 0 : index
      %c0_31 = arith.constant 0 : index
      %c0_32 = arith.constant 0 : index
      %47 = vector.load %arg10[%c0_29, %c0_30, %c0_31, %c0_32] : memref<1x1x8x256xf32, #tpu.memory_space<vmem>>, vector<1x1x8x256xf32>
      %48 = vector.shape_cast %47 : vector<1x1x8x256xf32> to vector<1x8x256xf32>
      %49 = vector.shape_cast %46 : vector<1x8x256xf32> to vector<1x1x8x256xf32>
      tpu.vector_store %arg10[%c0_29, %c0_30, %c0_31, %c0_32], %49 {strides = array<i32>} : memref<1x1x8x256xf32, #tpu.memory_space<vmem>>, vector<1x1x8x256xf32>,
    } else {
    }
    return
  }
  func.func @transform_0(%arg0: i32, %arg1: i32, %arg2: memref<1xi32, #tpu.memory_space<smem>>, %arg3: memref<1xi32, #tpu.memory_space<smem>>) -> (i32, i32, i32) {
    %0 = arith.index_cast %arg1 : i32 to index
    %1 = memref.load %arg2[%0] : memref<1xi32, #tpu.memory_space<smem>>
    %c0_i32 = arith.constant 0 : i32
    %c0_i32_0 = arith.constant 0 : i32
    return %arg0, %1, %c0_i32 : i32, i32, i32
  }
  func.func @transform_1(%arg0: i32, %arg1: i32, %arg2: memref<1xi32, #tpu.memory_space<smem>>, %arg3: memref<1xi32, #tpu.memory_space<smem>>) -> (i32, i32, i32) {
    %0 = arith.index_cast %arg1 : i32 to index
    %1 = memref.load %arg3[%0] : memref<1xi32, #tpu.memory_space<smem>>
    %c0_i32 = arith.constant 0 : i32
    %c0_i32_0 = arith.constant 0 : i32
    return %arg0, %1, %c0_i32 : i32, i32, i32
  }
  func.func @transform_2(%arg0: i32, %arg1: i32, %arg2: memref<1xi32, #tpu.memory_space<smem>>, %arg3: memref<1xi32, #tpu.memory_space<smem>>) -> (i32, i32, i32) {
    %0 = arith.index_cast %arg1 : i32 to index
    %1 = memref.load %arg2[%0] : memref<1xi32, #tpu.memory_space<smem>>
    %c0_i32 = arith.constant 0 : i32
    %c0_i32_0 = arith.constant 0 : i32
    return %arg0, %1, %c0_i32 : i32, i32, i32
  }
  func.func @transform_3(%arg0: i32, %arg1: i32, %arg2: memref<1xi32, #tpu.memory_space<smem>>, %arg3: memref<1xi32, #tpu.memory_space<smem>>) -> (i32, i32, i32) {
    %0 = arith.index_cast %arg1 : i32 to index
    %1 = memref.load %arg3[%0] : memref<1xi32, #tpu.memory_space<smem>>
    %c0_i32 = arith.constant 0 : i32
    %c0_i32_0 = arith.constant 0 : i32
    return %arg0, %c0_i32, %1 : i32, i32, i32
  }
  func.func @transform_4(%arg0: i32, %arg1: i32, %arg2: memref<1xi32, #tpu.memory_space<smem>>, %arg3: memref<1xi32, #tpu.memory_space<smem>>) -> (i32, i32, i32) {
    %0 = arith.index_cast %arg1 : i32 to index
    %1 = memref.load %arg2[%0] : memref<1xi32, #tpu.memory_space<smem>>
    %c0_i32 = arith.constant 0 : i32
    %c0_i32_0 = arith.constant 0 : i32
    return %arg0, %c0_i32, %1 : i32, i32, i32
  }
  func.func @transform_5(%arg0: i32, %arg1: i32, %arg2: memref<1xi32, #tpu.memory_space<smem>>, %arg3: memref<1xi32, #tpu.memory_space<smem>>) -> (i32, i32, i32) {
    %0 = arith.index_cast %arg1 : i32 to index
    %1 = memref.load %arg3[%0] : memref<1xi32, #tpu.memory_space<smem>>
    %c0_i32 = arith.constant 0 : i32
    %c0_i32_0 = arith.constant 0 : i32
    return %arg0, %c0_i32, %1 : i32, i32, i32
  }
  func.func @transform_6(%arg0: i32, %arg1: i32, %arg2: memref<1xi32, #tpu.memory_space<smem>>, %arg3: memref<1xi32, #tpu.memory_space<smem>>) -> (i32, i32, i32, i32) {
    %c0_i32 = arith.constant 0 : i32
    %c0_i32_0 = arith.constant 0 : i32
    %c0_i32_1 = arith.constant 0 : i32
    %c0_i32_2 = arith.constant 0 : i32
    return %arg0, %c0_i32, %c0_i32_0, %c0_i32_1 : i32, i32, i32, i32
  }
}

</mosaic_0001>

<llo_original>
// kernel: tpu_custom_call.1
$region0: #{tpu_custom_call.1}
  #allocation0 [shape = 'u32[]', space=smem, size = 0x4, offset = 0x4, fixed_abs, tag = 'smem constant byte address 0x4 - core index']
  #allocation1 [shape = 'u32[144,128]{1,0:T(1,128)}', space=vmem, size = 0x12000, scoped, tag = 'internal scratch']
  #allocation2 [shape = 'f32[1,8,256]{2,1,0:T(8,128)}', space=vmem, size = 0x2000, scoped, tag = 'scratch operand']
  #allocation3 [shape = 'f32[256,256]{1,0:T(8,128)}', space=vmem, size = 0x40000, scoped, tag = 'scratch operand']
  #allocation4 [shape = 's32[1]{0}', space=sflag, size = 0x4, scoped, tag = 'scoped memory for tpu_custom_call.1']
  #allocation5 [shape = 's32[1]{0:T(128)S(6)}', space=smem, size = 0x200, scoped, tag = 'prefetched SMEM operand 0']
  #allocation6 [shape = 's32[1]{0:T(128)S(6)}', space=smem, size = 0x200, scoped, tag = 'prefetched SMEM operand 1']
  %s0 = inlined_call_operand.<no memory space> [shape: s32[1], index: 0, kind: input, shape index: {}]
  %s1 = inlined_call_operand.<no memory space> [shape: s32[1], index: 1, kind: input, shape index: {}]
  %s2 = inlined_call_operand.vmem [shape: bf16[2,256,128], index: 2, kind: input, shape index: {}]
  %s3 = inlined_call_operand.vmem [shape: bf16[2,256,128], index: 3, kind: input, shape index: {}]
  %s4 = inlined_call_operand.vmem [shape: f32[2,256,1], index: 4, kind: input, shape index: {}]
  %s5 = inlined_call_operand.vmem [shape: f32[2,1,256], index: 5, kind: input, shape index: {}]
  %s6 = inlined_call_operand.hbm [shape: bf16[2,8,256], index: 6, kind: input, shape index: {}]
  %s7 = inlined_call_operand.hbm [shape: bf16[2,8,256], index: 7, kind: input, shape index: {}]
  %s8 = inlined_call_operand.hbm [shape: f32[2,1,8,256], index: 8, kind: output, shape index: {}]
  %s9 = sld [smem:[#allocation0]]
  $region81: #{tpu_custom_call.1} parent=0
    _
  %s11 = ssub.s32 1, %s9
  %s12 = scalar_select 0, %s11, %s9
  %13 = sst [smem:[#allocation5]] %s0
  %14 = sst [smem:[#allocation6]] %s1
  $region1: #{tpu_custom_call.1} parent=0
    #allocation7 [shape = 'u8[8192]{0}', space=vmem, size = 0x2000, scoped, tag = 'input window, operand 6']
    #allocation8 [shape = 's32[2]{0}', space=sflag, size = 0x8, scoped, tag = 'scoped memory for tpu_custom_call.1']
    #allocation9 [shape = 's32[2]{0}', space=sflag, size = 0x8, scoped, tag = 'scoped memory for tpu_custom_call.1']
    #allocation10 [shape = 'u8[8192]{0}', space=vmem, size = 0x2000, scoped, tag = 'input window, operand 7']
    #allocation11 [shape = 's32[2]{0}', space=sflag, size = 0x8, scoped, tag = 'scoped memory for tpu_custom_call.1']
    #allocation12 [shape = 'u8[16384]{0}', space=vmem, size = 0x4000, scoped, tag = 'output window, operand 0']
    %15 = vsyncpa [#allocation8], 0
    %s16 = scalar_lea.sflag [#allocation8], 1
    %17 = vsyncpa %s16, 0
    %18 = vsyncpa [#allocation11], 0
    %s19 = scalar_lea.sflag [#allocation11], 1
    %20 = vsyncpa %s19, 0
    %21 = vsyncpa [#allocation9], 0
    %s22 = scalar_lea.sflag [#allocation9], 1
    %23 = vsyncpa %s22, 0
    loop: start=0, step=1, limit=4
    $region2: #{tpu_custom_call.1} parent=1 // loop_pre_header
      _
    $region3: #{tpu_custom_call.1} parent=1 // loop_header
      %s25 = sphi 0, %s29
      %p26 = scmp.ge.s32.totalorder %s25, 4
      %s32 = sphi 0, %s44
      %s33 = sphi 0, %s40
      %s34 = sphi 0, %s32
      %s35 = sphi 0, %s33
      %s36 = sphi 0, %s34
      %s37 = sphi 0, %s35
      %s51 = sphi 0, %s53
      %s54 = sphi 0, %s51
      %s55 = sphi 0, %s54
      %s71 = sphi 0, %s55
      %s81 = sphi 0, %s83
      %s84 = sphi 0, %s81
      %s85 = sphi 0, %s84
      %s101 = sphi 0, %s85
      %s111 = sphi 0, %s113
      %s114 = sphi 0, %s111
      %s115 = sphi 0, %s114
      %s131 = sphi 0, %s115
      %s141 = sphi 0, %s143
      %s144 = sphi 0, %s141
      %s145 = sphi 0, %s144
      %s161 = sphi 0, %s145
      %s171 = sphi 0, %s173
      %s174 = sphi 0, %s171
      %s175 = sphi 0, %s174
      %s191 = sphi 0, %s175
      %s201 = sphi 0, %s203
      %s204 = sphi 0, %s201
      %s205 = sphi 0, %s204
      %s221 = sphi 0, %s205
      %s227 = sphi 0, %s229
      %s230 = sphi 0, %s227
      %s231 = sphi 0, %s230
      %s247 = sphi 0, %s231
    $region4: #{tpu_custom_call.1} parent=1 // loop_header_branch
      %28 = sbr.rel (%p26) target = $region8
    $region5: #{tpu_custom_call.1} parent=1 // loop_body
      %s30 = ssub.s32 %s25, 1
      %s31 = ssub.s32 %s25, 2
      %s38 = sadd.s32 1, %s33
      %p39 = scmp.ge.s32.totalorder %s38, 1
      %s40 = scalar_select %p39, 0, %s38
      %s41 = sadd.s32 1, %s32
      %s42 = scalar_select %p39, %s41, %s32
      %p43 = scmp.ge.s32.totalorder %s42, 2
      %s44 = scalar_select %p43, 0, %s42
      %s45 = sld [smem:[#allocation5 + %s33]]
      %s46 = sld [smem:[#allocation5 + %s40]]
      %s47 = ssub.s32 %s32, %s44
      %s48 = ssub.s32 %s45, %s46
      %s49 = sor.u32 %s47, %s48
      %p50 = scmp.eq.s32.totalorder %s49, 0
      %s52 = sadd.s32 %s51, 1
      %s53 = scalar_select %p50, %s51, %s52
      %p56 = pneg %p50
      %p57 = scmp.eq.s32.totalorder %s25, 1
      %p58 = por %p56, %p57
      %p59 = scmp.ne.s32.totalorder %s51, %s54
      %p60 = scmp.eq.s32.totalorder %s25, 0
      %p61 = por %p59, %p60
      %p62 = scmp.ne.s32.totalorder %s51, %s54
      %p63 = scmp.eq.s32.totalorder %s30, 1
      %p64 = por %p62, %p63
      %p65 = scmp.ne.s32.totalorder %s54, %s55
      %p66 = scmp.eq.s32.totalorder %s30, 0
      %p67 = por %p65, %p66
      %p68 = scmp.ne.s32.totalorder %s54, %s55
      %p69 = scmp.eq.s32.totalorder %s31, 1
      %p70 = por %p68, %p69
      %p72 = scmp.ne.s32.totalorder %s55, %s71
      %p73 = scmp.eq.s32.totalorder %s31, 0
      %p74 = por %p72, %p73
      %s75 = sld [smem:[#allocation6 + %s33]]
      %s76 = sld [smem:[#allocation6 + %s40]]
      %s77 = ssub.s32 %s32, %s44
      %s78 = ssub.s32 %s75, %s76
      %s79 = sor.u32 %s77, %s78
      %p80 = scmp.eq.s32.totalorder %s79, 0
      %s82 = sadd.s32 %s81, 1
      %s83 = scalar_select %p80, %s81, %s82
      %p86 = pneg %p80
      %p87 = scmp.eq.s32.totalorder %s25, 1
      %p88 = por %p86, %p87
      %p89 = scmp.ne.s32.totalorder %s81, %s84
      %p90 = scmp.eq.s32.totalorder %s25, 0
      %p91 = por %p89, %p90
      %p92 = scmp.ne.s32.totalorder %s81, %s84
      %p93 = scmp.eq.s32.totalorder %s30, 1
      %p94 = por %p92, %p93
      %p95 = scmp.ne.s32.totalorder %s84, %s85
      %p96 = scmp.eq.s32.totalorder %s30, 0
      %p97 = por %p95, %p96
      %p98 = scmp.ne.s32.totalorder %s84, %s85
      %p99 = scmp.eq.s32.totalorder %s31, 1
      %p100 = por %p98, %p99
      %p102 = scmp.ne.s32.totalorder %s85, %s101
      %p103 = scmp.eq.s32.totalorder %s31, 0
      %p104 = por %p102, %p103
      %s105 = sld [smem:[#allocation5 + %s33]]
      %s106 = sld [smem:[#allocation5 + %s40]]
      %s107 = ssub.s32 %s32, %s44
      %s108 = ssub.s32 %s105, %s106
      %s109 = sor.u32 %s107, %s108
      %p110 = scmp.eq.s32.totalorder %s109, 0
      %s112 = sadd.s32 %s111, 1
      %s113 = scalar_select %p110, %s111, %s112
      %p116 = pneg %p110
      %p117 = scmp.eq.s32.totalorder %s25, 1
      %p118 = por %p116, %p117
      %p119 = scmp.ne.s32.totalorder %s111, %s114
      %p120 = scmp.eq.s32.totalorder %s25, 0
      %p121 = por %p119, %p120
      %p122 = scmp.ne.s32.totalorder %s111, %s114
      %p123 = scmp.eq.s32.totalorder %s30, 1
      %p124 = por %p122, %p123
      %p125 = scmp.ne.s32.totalorder %s114, %s115
      %p126 = scmp.eq.s32.totalorder %s30, 0
      %p127 = por %p125, %p126
      %p128 = scmp.ne.s32.totalorder %s114, %s115
      %p129 = scmp.eq.s32.totalorder %s31, 1
      %p130 = por %p128, %p129
      %p132 = scmp.ne.s32.totalorder %s115, %s131
      %p133 = scmp.eq.s32.totalorder %s31, 0
      %p134 = por %p132, %p133
      %s135 = sld [smem:[#allocation6 + %s33]]
      %s136 = sld [smem:[#allocation6 + %s40]]
      %s137 = ssub.s32 %s32, %s44
      %s138 = ssub.s32 %s135, %s136
      %s139 = sor.u32 %s137, %s138
      %p140 = scmp.eq.s32.totalorder %s139, 0
      %s142 = sadd.s32 %s141, 1
      %s143 = scalar_select %p140, %s141, %s142
      %p146 = pneg %p140
      %p147 = scmp.eq.s32.totalorder %s25, 1
      %p148 = por %p146, %p147
      %p149 = scmp.ne.s32.totalorder %s141, %s144
      %p150 = scmp.eq.s32.totalorder %s25, 0
      %p151 = por %p149, %p150
      %p152 = scmp.ne.s32.totalorder %s141, %s144
      %p153 = scmp.eq.s32.totalorder %s30, 1
      %p154 = por %p152, %p153
      %p155 = scmp.ne.s32.totalorder %s144, %s145
      %p156 = scmp.eq.s32.totalorder %s30, 0
      %p157 = por %p155, %p156
      %p158 = scmp.ne.s32.totalorder %s144, %s145
      %p159 = scmp.eq.s32.totalorder %s31, 1
      %p160 = por %p158, %p159
      %p162 = scmp.ne.s32.totalorder %s145, %s161
      %p163 = scmp.eq.s32.totalorder %s31, 0
      %p164 = por %p162, %p163
      %s165 = sld [smem:[#allocation5 + %s33]]
      %s166 = sld [smem:[#allocation5 + %s40]]
      %s167 = ssub.s32 %s32, %s44
      %s168 = ssub.s32 %s165, %s166
      %s169 = sor.u32 %s167, %s168
      %p170 = scmp.eq.s32.totalorder %s169, 0
      %s172 = sadd.s32 %s171, 1
      %s173 = scalar_select %p170, %s171, %s172
      %p176 = pneg %p170
      %p177 = scmp.eq.s32.totalorder %s25, 1
      %p178 = por %p176, %p177
      %p179 = scmp.ne.s32.totalorder %s171, %s174
      %p180 = scmp.eq.s32.totalorder %s25, 0
      %p181 = por %p179, %p180
      %p182 = scmp.ne.s32.totalorder %s171, %s174
      %p183 = scmp.eq.s32.totalorder %s30, 1
      %p184 = por %p182, %p183
      %p185 = scmp.ne.s32.totalorder %s174, %s175
      %p186 = scmp.eq.s32.totalorder %s30, 0
      %p187 = por %p185, %p186
      %p188 = scmp.ne.s32.totalorder %s174, %s175
      %p189 = scmp.eq.s32.totalorder %s31, 1
      %p190 = por %p188, %p189
      %p192 = scmp.ne.s32.totalorder %s175, %s191
      %p193 = scmp.eq.s32.totalorder %s31, 0
      %p194 = por %p192, %p193
      %s195 = sld [smem:[#allocation6 + %s33]]
      %s196 = sld [smem:[#allocation6 + %s40]]
      %s197 = ssub.s32 %s32, %s44
      %s198 = ssub.s32 %s195, %s196
      %s199 = sor.u32 %s197, %s198
      %p200 = scmp.eq.s32.totalorder %s199, 0
      %s202 = sadd.s32 %s201, 1
      %s203 = scalar_select %p200, %s201, %s202
      %p206 = pneg %p200
      %p207 = scmp.eq.s32.totalorder %s25, 1
      %p208 = por %p206, %p207
      %p209 = scmp.ne.s32.totalorder %s201, %s204
      %p210 = scmp.eq.s32.totalorder %s25, 0
      %p211 = por %p209, %p210
      %p212 = scmp.ne.s32.totalorder %s201, %s204
      %p213 = scmp.eq.s32.totalorder %s30, 1
      %p214 = por %p212, %p213
      %p215 = scmp.ne.s32.totalorder %s204, %s205
      %p216 = scmp.eq.s32.totalorder %s30, 0
      %p217 = por %p215, %p216
      %p218 = scmp.ne.s32.totalorder %s204, %s205
      %p219 = scmp.eq.s32.totalorder %s31, 1
      %p220 = por %p218, %p219
      %p222 = scmp.ne.s32.totalorder %s205, %s221
      %p223 = scmp.eq.s32.totalorder %s31, 0
      %p224 = por %p222, %p223
      %s225 = ssub.s32 %s32, %s44
      %p226 = scmp.eq.s32.totalorder %s225, 0
      %s228 = sadd.s32 %s227, 1
      %s229 = scalar_select %p226, %s227, %s228
      %p232 = pneg %p226
      %p233 = scmp.eq.s32.totalorder %s25, 1
      %p234 = por %p232, %p233
      %p235 = scmp.ne.s32.totalorder %s227, %s230
      %p236 = scmp.eq.s32.totalorder %s25, 0
      %p237 = por %p235, %p236
      %p238 = scmp.ne.s32.totalorder %s227, %s230
      %p239 = scmp.eq.s32.totalorder %s30, 1
      %p240 = por %p238, %p239
      %p241 = scmp.ne.s32.totalorder %s230, %s231
      %p242 = scmp.eq.s32.totalorder %s30, 0
      %p243 = por %p241, %p242
      %p244 = scmp.ne.s32.totalorder %s230, %s231
      %p245 = scmp.eq.s32.totalorder %s31, 1
      %p246 = por %p244, %p245
      %p248 = scmp.ne.s32.totalorder %s231, %s247
      %p249 = scmp.eq.s32.totalorder %s31, 0
      %p250 = por %p248, %p249
      %p251 = scmp.le.s32.totalorder 1, %s25
      %p252 = scmp.lt.s32.totalorder %s25, 3
      %p253 = pnand %p251, %p252
      %p254 = pneg %p253
      // Predicated region
      $region9: #{tpu_custom_call.1} parent=5 // pred_check
        _
      $region10: #{tpu_custom_call.1} parent=5 // pred_check_branch
        %256 = sbr.rel (%p253) target = $region12
      $region11: #{tpu_custom_call.1} parent=5 // pred_region
        %s257 = ssub.s32 %s25, 1
      $region12: #{tpu_custom_call.1} parent=5 // pred_fallthru
        _
      %p258 = scmp.lt.s32.totalorder %s25, 2
      // Predicated region
      $region13: #{tpu_custom_call.1} parent=5 // pred_check
        %p259 = pneg %p258
      $region14: #{tpu_custom_call.1} parent=5 // pred_check_branch
        %261 = sbr.rel (%p259) target = $region16
      $region15: #{tpu_custom_call.1} parent=5 // pred_region
        // Predicated region
        $region17: #{tpu_custom_call.1} parent=15 // pred_check
          %p262 = pneg %p61
        $region18: #{tpu_custom_call.1} parent=15 // pred_check_branch
          %264 = sbr.rel (%p262) target = $region20
        $region19: #{tpu_custom_call.1} parent=15 // pred_region
          %s265 = sld [smem:[#allocation5 + %s33]]
          %s266 = smul.u32 32, %s265
          %p267 = scmp.lt.s32.totalorder %s32, 1
          %s268 = scalar_select %p267, %s32, 1
          %p269 = scmp.lt.s32.totalorder %s266, 31
          %s270 = scalar_select %p269, %s266, 31
          %s271 = smul.addr %s268, 32
          %s272 = sadd.s32 %s270, %s271
          %s273 = smul.addr %s272, 4
          %s274 = scalar_lea.vmem %s2, %s273
          %s275 = sld [smem:[#allocation5 + %s33]]
          %s276 = smul.u32 32, %s275
        $region20: #{tpu_custom_call.1} parent=15 // pred_fallthru
          _
        // Predicated region
        $region21: #{tpu_custom_call.1} parent=15 // pred_check
          %p277 = pneg %p91
        $region22: #{tpu_custom_call.1} parent=15 // pred_check_branch
          %279 = sbr.rel (%p277) target = $region24
        $region23: #{tpu_custom_call.1} parent=15 // pred_region
          %s280 = sld [smem:[#allocation6 + %s33]]
          %s281 = smul.u32 32, %s280
          %p282 = scmp.lt.s32.totalorder %s32, 1
          %s283 = scalar_select %p282, %s32, 1
          %p284 = scmp.lt.s32.totalorder %s281, 31
          %s285 = scalar_select %p284, %s281, 31
          %s286 = smul.addr %s283, 32
          %s287 = sadd.s32 %s285, %s286
          %s288 = smul.addr %s287, 4
          %s289 = scalar_lea.vmem %s3, %s288
          %s290 = sld [smem:[#allocation6 + %s33]]
          %s291 = smul.u32 32, %s290
        $region24: #{tpu_custom_call.1} parent=15 // pred_fallthru
          _
        // Predicated region
        $region25: #{tpu_custom_call.1} parent=15 // pred_check
          %p292 = pneg %p121
        $region26: #{tpu_custom_call.1} parent=15 // pred_check_branch
          %294 = sbr.rel (%p292) target = $region28
        $region27: #{tpu_custom_call.1} parent=15 // pred_region
          %s295 = sld [smem:[#allocation5 + %s33]]
          %s296 = smul.u32 32, %s295
          %p297 = scmp.lt.s32.totalorder %s32, 1
          %s298 = scalar_select %p297, %s32, 1
          %p299 = scmp.lt.s32.totalorder %s296, 31
          %s300 = scalar_select %p299, %s296, 31
          %s301 = smul.addr %s298, 32
          %s302 = sadd.s32 %s300, %s301
          %s303 = smul.addr %s302, 8
          %s304 = scalar_lea.vmem %s4, %s303
          %s305 = sld [smem:[#allocation5 + %s33]]
          %s306 = smul.u32 32, %s305
        $region28: #{tpu_custom_call.1} parent=15 // pred_fallthru
          _
        // Predicated region
        $region29: #{tpu_custom_call.1} parent=15 // pred_check
          %p307 = pneg %p151
        $region30: #{tpu_custom_call.1} parent=15 // pred_check_branch
          %309 = sbr.rel (%p307) target = $region32
        $region31: #{tpu_custom_call.1} parent=15 // pred_region
          %s310 = sld [smem:[#allocation6 + %s33]]
          %s311 = smul.u32 2, %s310
          %p312 = scmp.lt.s32.totalorder %s32, 1
          %s313 = scalar_select %p312, %s32, 1
          %p314 = scmp.lt.s32.totalorder %s311, 1
          %s315 = scalar_select %p314, %s311, 1
          %s316 = smul.addr %s313, 2
          %s317 = sadd.s32 %s315, %s316
          %s318 = scalar_lea.vmem %s5, %s317
          %s319 = sld [smem:[#allocation6 + %s33]]
          %s320 = smul.u32 2, %s319
        $region32: #{tpu_custom_call.1} parent=15 // pred_fallthru
          _
        // Predicated region
        $region33: #{tpu_custom_call.1} parent=15 // pred_check
          %p321 = pneg %p181
        $region34: #{tpu_custom_call.1} parent=15 // pred_check_branch
          %323 = sbr.rel (%p321) target = $region36
        $region35: #{tpu_custom_call.1} parent=15 // pred_region
          %s324 = sand.u32 %s171, 1
          %s325 = scalar_lea.sflag [#allocation8], %s324
          %s326 = sand.u32 %s171, 1
          %s327 = smul.addr %s326, 8
          %s328 = scalar_lea.vmem [#allocation7], %s327
          %s329 = sld [smem:[#allocation5 + %s33]]
          %s330 = smul.u32 2, %s329
          %s332 = ssub.s32 128, 128
          %333 = vsyncadd %s325, %s332
          %s334 = smul.addr %s32, 2
          %s335 = sadd.s32 %s330, %s334
          %s336 = smul.addr %s335, 64
          %s337 = scalar_lea.hbm %s6, %s336
          %s339 = sshll.u32 %s328, 4
          %s340 = int_to_ptr.vmem [resolvable:$true] %s339
          %342 = dma.hbm_to_vmem [thread:$0]  %s337, 128, %s340, %s325
        $region36: #{tpu_custom_call.1} parent=15 // pred_fallthru
          _
        // Predicated region
        $region37: #{tpu_custom_call.1} parent=15 // pred_check
          %p343 = pneg %p211
        $region38: #{tpu_custom_call.1} parent=15 // pred_check_branch
          %345 = sbr.rel (%p343) target = $region40
        $region39: #{tpu_custom_call.1} parent=15 // pred_region
          %s346 = sand.u32 %s201, 1
          %s347 = scalar_lea.sflag [#allocation11], %s346
          %s348 = sand.u32 %s201, 1
          %s349 = smul.addr %s348, 8
          %s350 = scalar_lea.vmem [#allocation10], %s349
          %s351 = sld [smem:[#allocation6 + %s33]]
          %s352 = smul.u32 2, %s351
          %s354 = ssub.s32 128, 128
          %355 = vsyncadd %s347, %s354
          %s356 = smul.addr %s32, 2
          %s357 = sadd.s32 %s352, %s356
          %s358 = smul.addr %s357, 64
          %s359 = scalar_lea.hbm %s7, %s358
          %s361 = sshll.u32 %s350, 4
          %s362 = int_to_ptr.vmem [resolvable:$true] %s361
          %364 = dma.hbm_to_vmem [thread:$0]  %s359, 128, %s362, %s347
        $region40: #{tpu_custom_call.1} parent=15 // pred_fallthru
          _
      $region16: #{tpu_custom_call.1} parent=5 // pred_fallthru
        _
      %p365 = scmp.le.s32.totalorder 1, %s25
      %p366 = scmp.lt.s32.totalorder %s25, 3
      %p367 = pnand %p365, %p366
      %p368 = pneg %p367
      // Predicated region
      $region41: #{tpu_custom_call.1} parent=5 // pred_check
        _
      $region42: #{tpu_custom_call.1} parent=5 // pred_check_branch
        %370 = sbr.rel (%p367) target = $region44
      $region43: #{tpu_custom_call.1} parent=5 // pred_region
        %s371 = ssub.s32 %s25, 1
        %s372 = sand.u32 %s174, 1
        %s373 = scalar_lea.sflag [#allocation8], %s372
        %s374 = sand.u32 %s174, 1
        %s375 = smul.addr %s374, 8
        %s376 = scalar_lea.vmem [#allocation7], %s375
        // Predicated region
        $region45: #{tpu_custom_call.1} parent=43 // pred_check
          %p377 = pneg %p187
        $region46: #{tpu_custom_call.1} parent=43 // pred_check_branch
          %379 = sbr.rel (%p377) target = $region48
        $region47: #{tpu_custom_call.1} parent=43 // pred_region
          %380 = dma.done %s373, 128
        $region48: #{tpu_custom_call.1} parent=43 // pred_fallthru
          _
        %s381 = sand.u32 %s204, 1
        %s382 = scalar_lea.sflag [#allocation11], %s381
        %s383 = sand.u32 %s204, 1
        %s384 = smul.addr %s383, 8
        %s385 = scalar_lea.vmem [#allocation10], %s384
        // Predicated region
        $region49: #{tpu_custom_call.1} parent=43 // pred_check
          %p386 = pneg %p217
        $region50: #{tpu_custom_call.1} parent=43 // pred_check_branch
          %388 = sbr.rel (%p386) target = $region52
        $region51: #{tpu_custom_call.1} parent=43 // pred_region
          %389 = dma.done %s382, 128
        $region52: #{tpu_custom_call.1} parent=43 // pred_fallthru
          _
        %s390 = sld [smem:[#allocation5 + %s35]]
        %s391 = smul.u32 32, %s390
        %p392 = scmp.lt.s32.totalorder %s34, 1
        %s393 = scalar_select %p392, %s34, 1
        %p394 = scmp.lt.s32.totalorder %s391, 31
        %s395 = scalar_select %p394, %s391, 31
        %s396 = smul.addr %s393, 32
        %s397 = sadd.s32 %s395, %s396
        %s398 = smul.addr %s397, 4
        %s399 = scalar_lea.vmem %s2, %s398
        %p400 = pneg %p67
        %p401 = pneg %p64
        %s402 = sld [smem:[#allocation6 + %s35]]
        %s403 = smul.u32 32, %s402
        %p404 = scmp.lt.s32.totalorder %s34, 1
        %s405 = scalar_select %p404, %s34, 1
        %p406 = scmp.lt.s32.totalorder %s403, 31
        %s407 = scalar_select %p406, %s403, 31
        %s408 = smul.addr %s405, 32
        %s409 = sadd.s32 %s407, %s408
        %s410 = smul.addr %s409, 4
        %s411 = scalar_lea.vmem %s3, %s410
        %p412 = pneg %p97
        %p413 = pneg %p94
        %s414 = sld [smem:[#allocation5 + %s35]]
        %s415 = smul.u32 32, %s414
        %p416 = scmp.lt.s32.totalorder %s34, 1
        %s417 = scalar_select %p416, %s34, 1
        %p418 = scmp.lt.s32.totalorder %s415, 31
        %s419 = scalar_select %p418, %s415, 31
        %s420 = smul.addr %s417, 32
        %s421 = sadd.s32 %s419, %s420
        %s422 = smul.addr %s421, 8
        %s423 = scalar_lea.vmem %s4, %s422
        %p424 = pneg %p127
        %p425 = pneg %p124
        %s426 = sld [smem:[#allocation6 + %s35]]
        %s427 = smul.u32 2, %s426
        %p428 = scmp.lt.s32.totalorder %s34, 1
        %s429 = scalar_select %p428, %s34, 1
        %p430 = scmp.lt.s32.totalorder %s427, 1
        %s431 = scalar_select %p430, %s427, 1
        %s432 = smul.addr %s429, 2
        %s433 = sadd.s32 %s431, %s432
        %s434 = scalar_lea.vmem %s5, %s433
        %p435 = pneg %p157
        %p436 = pneg %p154
        %s437 = sand.u32 %s174, 1
        %s438 = scalar_lea.sflag [#allocation8], %s437
        %s439 = sand.u32 %s174, 1
        %s440 = smul.addr %s439, 8
        %s441 = scalar_lea.vmem [#allocation7], %s440
        %p442 = pneg %p187
        %p443 = pneg %p184
        %s444 = sand.u32 %s204, 1
        %s445 = scalar_lea.sflag [#allocation11], %s444
        %s446 = sand.u32 %s204, 1
        %s447 = smul.addr %s446, 8
        %s448 = scalar_lea.vmem [#allocation10], %s447
        %p449 = pneg %p217
        %p450 = pneg %p214
        %p451 = pneg %p243
        %p452 = pneg %p240
        %s453 = sand.u32 %s230, 1
        %s454 = scalar_lea.sflag [#allocation9], %s453
        %s455 = sand.u32 %s230, 1
        %s456 = smul.addr %s455, 16
        %s457 = scalar_lea.vmem [#allocation12], %s456
        %s458 = sld [smem:[#allocation5 + %s35]]
        %s459 = smul.u32 32, %s458
        %p460 = scmp.lt.s32.totalorder %s34, 1
        %s461 = scalar_select %p460, %s34, 1
        %p462 = scmp.lt.s32.totalorder %s459, 31
        %s463 = scalar_select %p462, %s459, 31
        %s464 = smul.addr %s461, 32
        %s465 = sadd.s32 %s463, %s464
        %s466 = smul.addr %s465, 4
        %s467 = scalar_lea.vmem %s2, %s466
        %s468 = sld [smem:[#allocation5 + %s35]]
        %s469 = smul.u32 32, %s468
        %s470 = sld [smem:[#allocation6 + %s35]]
        %s471 = smul.u32 32, %s470
        %p472 = scmp.lt.s32.totalorder %s34, 1
        %s473 = scalar_select %p472, %s34, 1
        %p474 = scmp.lt.s32.totalorder %s471, 31
        %s475 = scalar_select %p474, %s471, 31
        %s476 = smul.addr %s473, 32
        %s477 = sadd.s32 %s475, %s476
        %s478 = smul.addr %s477, 4
        %s479 = scalar_lea.vmem %s3, %s478
        %s480 = sld [smem:[#allocation6 + %s35]]
        %s481 = smul.u32 32, %s480
        %s482 = sld [smem:[#allocation5 + %s35]]
        %s483 = smul.u32 32, %s482
        %p484 = scmp.lt.s32.totalorder %s34, 1
        %s485 = scalar_select %p484, %s34, 1
        %p486 = scmp.lt.s32.totalorder %s483, 31
        %s487 = scalar_select %p486, %s483, 31
        %s488 = smul.addr %s485, 32
        %s489 = sadd.s32 %s487, %s488
        %s490 = smul.addr %s489, 8
        %s491 = scalar_lea.vmem %s4, %s490
        %s492 = sld [smem:[#allocation5 + %s35]]
        %s493 = smul.u32 32, %s492
        %s494 = sld [smem:[#allocation6 + %s35]]
        %s495 = smul.u32 2, %s494
        %p496 = scmp.lt.s32.totalorder %s34, 1
        %s497 = scalar_select %p496, %s34, 1
        %p498 = scmp.lt.s32.totalorder %s495, 1
        %s499 = scalar_select %p498, %s495, 1
        %s500 = smul.addr %s497, 2
        %s501 = sadd.s32 %s499, %s500
        %s502 = scalar_lea.vmem %s5, %s501
        %s503 = sld [smem:[#allocation6 + %s35]]
        %s504 = smul.u32 2, %s503
        %s505 = sld [smem:[#allocation5 + %s35]]
        %s506 = smul.u32 2, %s505
        %s507 = sld [smem:[#allocation6 + %s35]]
        %s508 = smul.u32 2, %s507
        %s510 = sld [smem:[#allocation5 + %s35]]
        %s511 = sld [smem:[#allocation6 + %s35]]
        %p512 = scmp.eq.s32.totalorder %s35, 0
        // Predicated region
        $region53: #{tpu_custom_call.1} parent=43 // pred_check
          %p513 = pneg %p512
        $region54: #{tpu_custom_call.1} parent=43 // pred_check_branch
          %515 = sbr.rel (%p513) target = $region56
        $region55: #{tpu_custom_call.1} parent=43 // pred_region
          %516 = vst [vmem:[#allocation2] sm:$0xff] 0.0
          %517 = vst [vmem:[#allocation2 + $0x8] sm:$0xff] 0.0
          %v518 = vlaneseq
          %v519 = vshrl.u32 %v518, 7
          %v520 = vadd.s32 %v519, 8
          %v521 = vadd.s32 %v519, 16
          %v522 = vadd.s32 %v519, 24
          %v523 = vadd.s32 %v519, 32
          %v524 = vadd.s32 %v519, 40
          %v525 = vadd.s32 %v519, 48
          %v526 = vadd.s32 %v519, 56
          %v527 = vadd.s32 %v519, 64
          %v528 = vadd.s32 %v519, 72
          %v529 = vadd.s32 %v519, 80
          %v530 = vadd.s32 %v519, 88
          %v531 = vadd.s32 %v519, 96
          %v532 = vadd.s32 %v519, 104
          %v533 = vadd.s32 %v519, 112
          %v534 = vadd.s32 %v519, 120
          %v535 = vadd.s32 %v519, 128
          %v536 = vadd.s32 %v519, 136
          %v537 = vadd.s32 %v519, 144
          %v538 = vadd.s32 %v519, 152
          %v539 = vadd.s32 %v519, 160
          %v540 = vadd.s32 %v519, 168
          %v541 = vadd.s32 %v519, 176
          %v542 = vadd.s32 %v519, 184
          %v543 = vadd.s32 %v519, 192
          %v544 = vadd.s32 %v519, 200
          %v545 = vadd.s32 %v519, 208
          %v546 = vadd.s32 %v519, 216
          %v547 = vadd.s32 %v519, 224
          %v548 = vadd.s32 %v519, 232
          %v549 = vadd.s32 %v519, 240
          %v550 = vadd.s32 %v519, 248
          %v551 = vlaneseq
          %v552 = vand.u32 %v551, 127
          %v553 = vadd.s32 %v552, 128
          %vm554 = vcmp.eq.s32.totalorder %v519, %v552
          %vm555 = vcmp.eq.s32.totalorder %v519, %v553
          %vm556 = vcmp.eq.s32.totalorder %v520, %v552
          %vm557 = vcmp.eq.s32.totalorder %v520, %v553
          %vm558 = vcmp.eq.s32.totalorder %v521, %v552
          %vm559 = vcmp.eq.s32.totalorder %v521, %v553
          %vm560 = vcmp.eq.s32.totalorder %v522, %v552
          %vm561 = vcmp.eq.s32.totalorder %v522, %v553
          %vm562 = vcmp.eq.s32.totalorder %v523, %v552
          %vm563 = vcmp.eq.s32.totalorder %v523, %v553
          %vm564 = vcmp.eq.s32.totalorder %v524, %v552
          %vm565 = vcmp.eq.s32.totalorder %v524, %v553
          %vm566 = vcmp.eq.s32.totalorder %v525, %v552
          %vm567 = vcmp.eq.s32.totalorder %v525, %v553
          %vm568 = vcmp.eq.s32.totalorder %v526, %v552
          %vm569 = vcmp.eq.s32.totalorder %v526, %v553
          %vm570 = vcmp.eq.s32.totalorder %v527, %v552
          %vm571 = vcmp.eq.s32.totalorder %v527, %v553
          %vm572 = vcmp.eq.s32.totalorder %v528, %v552
          %vm573 = vcmp.eq.s32.totalorder %v528, %v553
          %vm574 = vcmp.eq.s32.totalorder %v529, %v552
          %vm575 = vcmp.eq.s32.totalorder %v529, %v553
          %vm576 = vcmp.eq.s32.totalorder %v530, %v552
          %vm577 = vcmp.eq.s32.totalorder %v530, %v553
          %vm578 = vcmp.eq.s32.totalorder %v531, %v552
          %vm579 = vcmp.eq.s32.totalorder %v531, %v553
          %vm580 = vcmp.eq.s32.totalorder %v532, %v552
          %vm581 = vcmp.eq.s32.totalorder %v532, %v553
          %vm582 = vcmp.eq.s32.totalorder %v533, %v552
          %vm583 = vcmp.eq.s32.totalorder %v533, %v553
          %vm584 = vcmp.eq.s32.totalorder %v534, %v552
          %vm585 = vcmp.eq.s32.totalorder %v534, %v553
          %vm586 = vcmp.eq.s32.totalorder %v535, %v552
          %vm587 = vcmp.eq.s32.totalorder %v535, %v553
          %vm588 = vcmp.eq.s32.totalorder %v536, %v552
          %vm589 = vcmp.eq.s32.totalorder %v536, %v553
          %vm590 = vcmp.eq.s32.totalorder %v537, %v552
          %vm591 = vcmp.eq.s32.totalorder %v537, %v553
          %vm592 = vcmp.eq.s32.totalorder %v538, %v552
          %vm593 = vcmp.eq.s32.totalorder %v538, %v553
          %vm594 = vcmp.eq.s32.totalorder %v539, %v552
          %vm595 = vcmp.eq.s32.totalorder %v539, %v553
          %vm596 = vcmp.eq.s32.totalorder %v540, %v552
          %vm597 = vcmp.eq.s32.totalorder %v540, %v553
          %vm598 = vcmp.eq.s32.totalorder %v541, %v552
          %vm599 = vcmp.eq.s32.totalorder %v541, %v553
          %vm600 = vcmp.eq.s32.totalorder %v542, %v552
          %vm601 = vcmp.eq.s32.totalorder %v542, %v553
          %vm602 = vcmp.eq.s32.totalorder %v543, %v552
          %vm603 = vcmp.eq.s32.totalorder %v543, %v553
          %vm604 = vcmp.eq.s32.totalorder %v544, %v552
          %vm605 = vcmp.eq.s32.totalorder %v544, %v553
          %vm606 = vcmp.eq.s32.totalorder %v545, %v552
          %vm607 = vcmp.eq.s32.totalorder %v545, %v553
          %vm608 = vcmp.eq.s32.totalorder %v546, %v552
          %vm609 = vcmp.eq.s32.totalorder %v546, %v553
          %vm610 = vcmp.eq.s32.totalorder %v547, %v552
          %vm611 = vcmp.eq.s32.totalorder %v547, %v553
          %vm612 = vcmp.eq.s32.totalorder %v548, %v552
          %vm613 = vcmp.eq.s32.totalorder %v548, %v553
          %vm614 = vcmp.eq.s32.totalorder %v549, %v552
          %vm615 = vcmp.eq.s32.totalorder %v549, %v553
          %vm616 = vcmp.eq.s32.totalorder %v550, %v552
          %vm617 = vcmp.eq.s32.totalorder %v550, %v553
          %v618 = vsel %vm554, 0.0, 1.0
          %v619 = vsel %vm555, 0.0, 1.0
          %v620 = vsel %vm556, 0.0, 1.0
          %v621 = vsel %vm557, 0.0, 1.0
          %v622 = vsel %vm558, 0.0, 1.0
          %v623 = vsel %vm559, 0.0, 1.0
          %v624 = vsel %vm560, 0.0, 1.0
          %v625 = vsel %vm561, 0.0, 1.0
          %v626 = vsel %vm562, 0.0, 1.0
          %v627 = vsel %vm563, 0.0, 1.0
          %v628 = vsel %vm564, 0.0, 1.0
          %v629 = vsel %vm565, 0.0, 1.0
          %v630 = vsel %vm566, 0.0, 1.0
          %v631 = vsel %vm567, 0.0, 1.0
          %v632 = vsel %vm568, 0.0, 1.0
          %v633 = vsel %vm569, 0.0, 1.0
          %v634 = vsel %vm570, 0.0, 1.0
          %v635 = vsel %vm571, 0.0, 1.0
          %v636 = vsel %vm572, 0.0, 1.0
          %v637 = vsel %vm573, 0.0, 1.0
          %v638 = vsel %vm574, 0.0, 1.0
          %v639 = vsel %vm575, 0.0, 1.0
          %v640 = vsel %vm576, 0.0, 1.0
          %v641 = vsel %vm577, 0.0, 1.0
          %v642 = vsel %vm578, 0.0, 1.0
          %v643 = vsel %vm579, 0.0, 1.0
          %v644 = vsel %vm580, 0.0, 1.0
          %v645 = vsel %vm581, 0.0, 1.0
          %v646 = vsel %vm582, 0.0, 1.0
          %v647 = vsel %vm583, 0.0, 1.0
          %v648 = vsel %vm584, 0.0, 1.0
          %v649 = vsel %vm585, 0.0, 1.0
          %v650 = vsel %vm586, 0.0, 1.0
          %v651 = vsel %vm587, 0.0, 1.0
          %v652 = vsel %vm588, 0.0, 1.0
          %v653 = vsel %vm589, 0.0, 1.0
          %v654 = vsel %vm590, 0.0, 1.0
          %v655 = vsel %vm591, 0.0, 1.0
          %v656 = vsel %vm592, 0.0, 1.0
          %v657 = vsel %vm593, 0.0, 1.0
          %v658 = vsel %vm594, 0.0, 1.0
          %v659 = vsel %vm595, 0.0, 1.0
          %v660 = vsel %vm596, 0.0, 1.0
          %v661 = vsel %vm597, 0.0, 1.0
          %v662 = vsel %vm598, 0.0, 1.0
          %v663 = vsel %vm599, 0.0, 1.0
          %v664 = vsel %vm600, 0.0, 1.0
          %v665 = vsel %vm601, 0.0, 1.0
          %v666 = vsel %vm602, 0.0, 1.0
          %v667 = vsel %vm603, 0.0, 1.0
          %v668 = vsel %vm604, 0.0, 1.0
          %v669 = vsel %vm605, 0.0, 1.0
          %v670 = vsel %vm606, 0.0, 1.0
          %v671 = vsel %vm607, 0.0, 1.0
          %v672 = vsel %vm608, 0.0, 1.0
          %v673 = vsel %vm609, 0.0, 1.0
          %v674 = vsel %vm610, 0.0, 1.0
          %v675 = vsel %vm611, 0.0, 1.0
          %v676 = vsel %vm612, 0.0, 1.0
          %v677 = vsel %vm613, 0.0, 1.0
          %v678 = vsel %vm614, 0.0, 1.0
          %v679 = vsel %vm615, 0.0, 1.0
          %v680 = vsel %vm616, 0.0, 1.0
          %v681 = vsel %vm617, 0.0, 1.0
          %682 = vst [vmem:[#allocation3] sm:$0xff] %v618
          %683 = vst [vmem:[#allocation3 + $0x8] sm:$0xff] %v619
          %684 = vst [vmem:[#allocation3 + $0x10] sm:$0xff] %v620
          %685 = vst [vmem:[#allocation3 + $0x18] sm:$0xff] %v621
          %686 = vst [vmem:[#allocation3 + $0x20] sm:$0xff] %v622
          %687 = vst [vmem:[#allocation3 + $0x28] sm:$0xff] %v623
          %688 = vst [vmem:[#allocation3 + $0x30] sm:$0xff] %v624
          %689 = vst [vmem:[#allocation3 + $0x38] sm:$0xff] %v625
          %690 = vst [vmem:[#allocation3 + $0x40] sm:$0xff] %v626
          %691 = vst [vmem:[#allocation3 + $0x48] sm:$0xff] %v627
          %692 = vst [vmem:[#allocation3 + $0x50] sm:$0xff] %v628
          %693 = vst [vmem:[#allocation3 + $0x58] sm:$0xff] %v629
          %694 = vst [vmem:[#allocation3 + $0x60] sm:$0xff] %v630
          %695 = vst [vmem:[#allocation3 + $0x68] sm:$0xff] %v631
          %696 = vst [vmem:[#allocation3 + $0x70] sm:$0xff] %v632
          %697 = vst [vmem:[#allocation3 + $0x78] sm:$0xff] %v633
          %698 = vst [vmem:[#allocation3 + $0x80] sm:$0xff] %v634
          %699 = vst [vmem:[#allocation3 + $0x88] sm:$0xff] %v635
          %700 = vst [vmem:[#allocation3 + $0x90] sm:$0xff] %v636
          %701 = vst [vmem:[#allocation3 + $0x98] sm:$0xff] %v637
          %702 = vst [vmem:[#allocation3 + $0xa0] sm:$0xff] %v638
          %703 = vst [vmem:[#allocation3 + $0xa8] sm:$0xff] %v639
          %704 = vst [vmem:[#allocation3 + $0xb0] sm:$0xff] %v640
          %705 = vst [vmem:[#allocation3 + $0xb8] sm:$0xff] %v641
          %706 = vst [vmem:[#allocation3 + $0xc0] sm:$0xff] %v642
          %707 = vst [vmem:[#allocation3 + $0xc8] sm:$0xff] %v643
          %708 = vst [vmem:[#allocation3 + $0xd0] sm:$0xff] %v644
          %709 = vst [vmem:[#allocation3 + $0xd8] sm:$0xff] %v645
          %710 = vst [vmem:[#allocation3 + $0xe0] sm:$0xff] %v646
          %711 = vst [vmem:[#allocation3 + $0xe8] sm:$0xff] %v647
          %712 = vst [vmem:[#allocation3 + $0xf0] sm:$0xff] %v648
          %713 = vst [vmem:[#allocation3 + $0xf8] sm:$0xff] %v649
          %714 = vst [vmem:[#allocation3 + $0x100] sm:$0xff] %v650
          %715 = vst [vmem:[#allocation3 + $0x108] sm:$0xff] %v651
          %716 = vst [vmem:[#allocation3 + $0x110] sm:$0xff] %v652
          %717 = vst [vmem:[#allocation3 + $0x118] sm:$0xff] %v653
          %718 = vst [vmem:[#allocation3 + $0x120] sm:$0xff] %v654
          %719 = vst [vmem:[#allocation3 + $0x128] sm:$0xff] %v655
          %720 = vst [vmem:[#allocation3 + $0x130] sm:$0xff] %v656
          %721 = vst [vmem:[#allocation3 + $0x138] sm:$0xff] %v657
          %722 = vst [vmem:[#allocation3 + $0x140] sm:$0xff] %v658
          %723 = vst [vmem:[#allocation3 + $0x148] sm:$0xff] %v659
          %724 = vst [vmem:[#allocation3 + $0x150] sm:$0xff] %v660
          %725 = vst [vmem:[#allocation3 + $0x158] sm:$0xff] %v661
          %726 = vst [vmem:[#allocation3 + $0x160] sm:$0xff] %v662
          %727 = vst [vmem:[#allocation3 + $0x168] sm:$0xff] %v663
          %728 = vst [vmem:[#allocation3 + $0x170] sm:$0xff] %v664
          %729 = vst [vmem:[#allocation3 + $0x178] sm:$0xff] %v665
          %730 = vst [vmem:[#allocation3 + $0x180] sm:$0xff] %v666
          %731 = vst [vmem:[#allocation3 + $0x188] sm:$0xff] %v667
          %732 = vst [vmem:[#allocation3 + $0x190] sm:$0xff] %v668
          %733 = vst [vmem:[#allocation3 + $0x198] sm:$0xff] %v669
          %734 = vst [vmem:[#allocation3 + $0x1a0] sm:$0xff] %v670
          %735 = vst [vmem:[#allocation3 + $0x1a8] sm:$0xff] %v671
          %736 = vst [vmem:[#allocation3 + $0x1b0] sm:$0xff] %v672
          %737 = vst [vmem:[#allocation3 + $0x1b8] sm:$0xff] %v673
          %738 = vst [vmem:[#allocation3 + $0x1c0] sm:$0xff] %v674
          %739 = vst [vmem:[#allocation3 + $0x1c8] sm:$0xff] %v675
          %740 = vst [vmem:[#allocation3 + $0x1d0] sm:$0xff] %v676
          %741 = vst [vmem:[#allocation3 + $0x1d8] sm:$0xff] %v677
          %742 = vst [vmem:[#allocation3 + $0x1e0] sm:$0xff] %v678
          %743 = vst [vmem:[#allocation3 + $0x1e8] sm:$0xff] %v679
          %744 = vst [vmem:[#allocation3 + $0x1f0] sm:$0xff] %v680
          %745 = vst [vmem:[#allocation3 + $0x1f8] sm:$0xff] %v681
        $region56: #{tpu_custom_call.1} parent=43 // pred_fallthru
          _
        %v746 = vld [vmem:[%s467] sm:$0xf]
        %v747 = vld [vmem:[%s467 + $0x4] sm:$0xf]
        %v748 = vld [vmem:[%s467 + $0x8] sm:$0xf]
        %v749 = vld [vmem:[%s467 + $0xc] sm:$0xf]
        %v750 = vld [vmem:[%s467 + $0x10] sm:$0xf]
        %v751 = vld [vmem:[%s467 + $0x14] sm:$0xf]
        %v752 = vld [vmem:[%s467 + $0x18] sm:$0xf]
        %v753 = vld [vmem:[%s467 + $0x1c] sm:$0xf]
        %v754 = vld [vmem:[%s467 + $0x20] sm:$0xf]
        %v755 = vld [vmem:[%s467 + $0x24] sm:$0xf]
        %v756 = vld [vmem:[%s467 + $0x28] sm:$0xf]
        %v757 = vld [vmem:[%s467 + $0x2c] sm:$0xf]
        %v758 = vld [vmem:[%s467 + $0x30] sm:$0xf]
        %v759 = vld [vmem:[%s467 + $0x34] sm:$0xf]
        %v760 = vld [vmem:[%s467 + $0x38] sm:$0xf]
        %v761 = vld [vmem:[%s467 + $0x3c] sm:$0xf]
        %v762 = vld [vmem:[%s467 + $0x40] sm:$0xf]
        %v763 = vld [vmem:[%s467 + $0x44] sm:$0xf]
        %v764 = vld [vmem:[%s467 + $0x48] sm:$0xf]
        %v765 = vld [vmem:[%s467 + $0x4c] sm:$0xf]
        %v766 = vld [vmem:[%s467 + $0x50] sm:$0xf]
        %v767 = vld [vmem:[%s467 + $0x54] sm:$0xf]
        %v768 = vld [vmem:[%s467 + $0x58] sm:$0xf]
        %v769 = vld [vmem:[%s467 + $0x5c] sm:$0xf]
        %v770 = vld [vmem:[%s467 + $0x60] sm:$0xf]
        %v771 = vld [vmem:[%s467 + $0x64] sm:$0xf]
        %v772 = vld [vmem:[%s467 + $0x68] sm:$0xf]
        %v773 = vld [vmem:[%s467 + $0x6c] sm:$0xf]
        %v774 = vld [vmem:[%s467 + $0x70] sm:$0xf]
        %v775 = vld [vmem:[%s467 + $0x74] sm:$0xf]
        %v776 = vld [vmem:[%s467 + $0x78] sm:$0xf]
        %v777 = vld [vmem:[%s467 + $0x7c] sm:$0xf]
        %v778 = vld [vmem:[%s479] sm:$0xf]
        %v779 = vld [vmem:[%s479 + $0x4] sm:$0xf]
        %v780 = vld [vmem:[%s479 + $0x8] sm:$0xf]
        %v781 = vld [vmem:[%s479 + $0xc] sm:$0xf]
        %v782 = vld [vmem:[%s479 + $0x10] sm:$0xf]
        %v783 = vld [vmem:[%s479 + $0x14] sm:$0xf]
        %v784 = vld [vmem:[%s479 + $0x18] sm:$0xf]
        %v785 = vld [vmem:[%s479 + $0x1c] sm:$0xf]
        %v786 = vld [vmem:[%s479 + $0x20] sm:$0xf]
        %v787 = vld [vmem:[%s479 + $0x24] sm:$0xf]
        %v788 = vld [vmem:[%s479 + $0x28] sm:$0xf]
        %v789 = vld [vmem:[%s479 + $0x2c] sm:$0xf]
        %v790 = vld [vmem:[%s479 + $0x30] sm:$0xf]
        %v791 = vld [vmem:[%s479 + $0x34] sm:$0xf]
        %v792 = vld [vmem:[%s479 + $0x38] sm:$0xf]
        %v793 = vld [vmem:[%s479 + $0x3c] sm:$0xf]
        %v794 = vld [vmem:[%s479 + $0x40] sm:$0xf]
        %v795 = vld [vmem:[%s479 + $0x44] sm:$0xf]
        %v796 = vld [vmem:[%s479 + $0x48] sm:$0xf]
        %v797 = vld [vmem:[%s479 + $0x4c] sm:$0xf]
        %v798 = vld [vmem:[%s479 + $0x50] sm:$0xf]
        %v799 = vld [vmem:[%s479 + $0x54] sm:$0xf]
        %v800 = vld [vmem:[%s479 + $0x58] sm:$0xf]
        %v801 = vld [vmem:[%s479 + $0x5c] sm:$0xf]
        %v802 = vld [vmem:[%s479 + $0x60] sm:$0xf]
        %v803 = vld [vmem:[%s479 + $0x64] sm:$0xf]
        %v804 = vld [vmem:[%s479 + $0x68] sm:$0xf]
        %v805 = vld [vmem:[%s479 + $0x6c] sm:$0xf]
        %v806 = vld [vmem:[%s479 + $0x70] sm:$0xf]
        %v807 = vld [vmem:[%s479 + $0x74] sm:$0xf]
        %v808 = vld [vmem:[%s479 + $0x78] sm:$0xf]
        %v809 = vld [vmem:[%s479 + $0x7c] sm:$0xf]
        %v810 = vld [vmem:[%s491] sm:$0xff]
        %v811 = vld [vmem:[%s491 + $0x8] sm:$0xff]
        %v812 = vld [vmem:[%s491 + $0x10] sm:$0xff]
        %v813 = vld [vmem:[%s491 + $0x18] sm:$0xff]
        %v814 = vld [vmem:[%s491 + $0x20] sm:$0xff]
        %v815 = vld [vmem:[%s491 + $0x28] sm:$0xff]
        %v816 = vld [vmem:[%s491 + $0x30] sm:$0xff]
        %v817 = vld [vmem:[%s491 + $0x38] sm:$0xff]
        %v818 = vld [vmem:[%s491 + $0x40] sm:$0xff]
        %v819 = vld [vmem:[%s491 + $0x48] sm:$0xff]
        %v820 = vld [vmem:[%s491 + $0x50] sm:$0xff]
        %v821 = vld [vmem:[%s491 + $0x58] sm:$0xff]
        %v822 = vld [vmem:[%s491 + $0x60] sm:$0xff]
        %v823 = vld [vmem:[%s491 + $0x68] sm:$0xff]
        %v824 = vld [vmem:[%s491 + $0x70] sm:$0xff]
        %v825 = vld [vmem:[%s491 + $0x78] sm:$0xff]
        %v826 = vld [vmem:[%s491 + $0x80] sm:$0xff]
        %v827 = vld [vmem:[%s491 + $0x88] sm:$0xff]
        %v828 = vld [vmem:[%s491 + $0x90] sm:$0xff]
        %v829 = vld [vmem:[%s491 + $0x98] sm:$0xff]
        %v830 = vld [vmem:[%s491 + $0xa0] sm:$0xff]
        %v831 = vld [vmem:[%s491 + $0xa8] sm:$0xff]
        %v832 = vld [vmem:[%s491 + $0xb0] sm:$0xff]
        %v833 = vld [vmem:[%s491 + $0xb8] sm:$0xff]
        %v834 = vld [vmem:[%s491 + $0xc0] sm:$0xff]
        %v835 = vld [vmem:[%s491 + $0xc8] sm:$0xff]
        %v836 = vld [vmem:[%s491 + $0xd0] sm:$0xff]
        %v837 = vld [vmem:[%s491 + $0xd8] sm:$0xff]
        %v838 = vld [vmem:[%s491 + $0xe0] sm:$0xff]
        %v839 = vld [vmem:[%s491 + $0xe8] sm:$0xff]
        %v840 = vld [vmem:[%s491 + $0xf0] sm:$0xff]
        %v841 = vld [vmem:[%s491 + $0xf8] sm:$0xff]
        %v842 = vld [vmem:[%s502] sm:$0x3]
        %v875 = vunpack.c.l.b16 %v746
        %v876 = vunpack.c.l.b16 %v747
        %v877 = vunpack.c.l.b16 %v748
        %v878 = vunpack.c.l.b16 %v749
        %v879 = vunpack.c.l.b16 %v750
        %v880 = vunpack.c.l.b16 %v751
        %v881 = vunpack.c.l.b16 %v752
        %v882 = vunpack.c.l.b16 %v753
        %v883 = vunpack.c.l.b16 %v754
        %v884 = vunpack.c.l.b16 %v755
        %v885 = vunpack.c.l.b16 %v756
        %v886 = vunpack.c.l.b16 %v757
        %v887 = vunpack.c.l.b16 %v758
        %v888 = vunpack.c.l.b16 %v759
        %v889 = vunpack.c.l.b16 %v760
        %v890 = vunpack.c.l.b16 %v761
        %v891 = vunpack.c.l.b16 %v762
        %v892 = vunpack.c.l.b16 %v763
        %v893 = vunpack.c.l.b16 %v764
        %v894 = vunpack.c.l.b16 %v765
        %v895 = vunpack.c.l.b16 %v766
        %v896 = vunpack.c.l.b16 %v767
        %v897 = vunpack.c.l.b16 %v768
        %v898 = vunpack.c.l.b16 %v769
        %v899 = vunpack.c.l.b16 %v770
        %v900 = vunpack.c.l.b16 %v771
        %v901 = vunpack.c.l.b16 %v772
        %v902 = vunpack.c.l.b16 %v773
        %v903 = vunpack.c.l.b16 %v774
        %v904 = vunpack.c.l.b16 %v775
        %v905 = vunpack.c.l.b16 %v776
        %v906 = vunpack.c.l.b16 %v777
        %v907 = vpack.c.b16 %v876, %v875
        %v908 = vpack.c.b16 %v878, %v877
        %v909 = vpack.c.b16 %v880, %v879
        %v910 = vpack.c.b16 %v882, %v881
        %v911 = vpack.c.b16 %v884, %v883
        %v912 = vpack.c.b16 %v886, %v885
        %v913 = vpack.c.b16 %v888, %v887
        %v914 = vpack.c.b16 %v890, %v889
        %v915 = vpack.c.b16 %v892, %v891
        %v916 = vpack.c.b16 %v894, %v893
        %v917 = vpack.c.b16 %v896, %v895
        %v918 = vpack.c.b16 %v898, %v897
        %v919 = vpack.c.b16 %v900, %v899
        %v920 = vpack.c.b16 %v902, %v901
        %v921 = vpack.c.b16 %v904, %v903
        %v922 = vpack.c.b16 %v906, %v905
        %v971 = vunpack.c.l.b16 %v778
        %v972 = vunpack.c.l.b16 %v779
        %v973 = vunpack.c.l.b16 %v780
        %v974 = vunpack.c.l.b16 %v781
        %v975 = vunpack.c.l.b16 %v782
        %v976 = vunpack.c.l.b16 %v783
        %v977 = vunpack.c.l.b16 %v784
        %v978 = vunpack.c.l.b16 %v785
        %v979 = vunpack.c.l.b16 %v786
        %v980 = vunpack.c.l.b16 %v787
        %v981 = vunpack.c.l.b16 %v788
        %v982 = vunpack.c.l.b16 %v789
        %v983 = vunpack.c.l.b16 %v790
        %v984 = vunpack.c.l.b16 %v791
        %v985 = vunpack.c.l.b16 %v792
        %v986 = vunpack.c.l.b16 %v793
        %v987 = vunpack.c.l.b16 %v794
        %v988 = vunpack.c.l.b16 %v795
        %v989 = vunpack.c.l.b16 %v796
        %v990 = vunpack.c.l.b16 %v797
        %v991 = vunpack.c.l.b16 %v798
        %v992 = vunpack.c.l.b16 %v799
        %v993 = vunpack.c.l.b16 %v800
        %v994 = vunpack.c.l.b16 %v801
        %v995 = vunpack.c.l.b16 %v802
        %v996 = vunpack.c.l.b16 %v803
        %v997 = vunpack.c.l.b16 %v804
        %v998 = vunpack.c.l.b16 %v805
        %v999 = vunpack.c.l.b16 %v806
        %v1000 = vunpack.c.l.b16 %v807
        %v1001 = vunpack.c.l.b16 %v808
        %v1002 = vunpack.c.l.b16 %v809
        %v1003 = vpack.c.b16 %v972, %v971
        %v1004 = vpack.c.b16 %v974, %v973
        %v1005 = vpack.c.b16 %v976, %v975
        %v1006 = vpack.c.b16 %v978, %v977
        %v1007 = vpack.c.b16 %v980, %v979
        %v1008 = vpack.c.b16 %v982, %v981
        %v1009 = vpack.c.b16 %v984, %v983
        %v1010 = vpack.c.b16 %v986, %v985
        %v1011 = vpack.c.b16 %v988, %v987
        %v1012 = vpack.c.b16 %v990, %v989
        %v1013 = vpack.c.b16 %v992, %v991
        %v1014 = vpack.c.b16 %v994, %v993
        %v1015 = vpack.c.b16 %v996, %v995
        %v1016 = vpack.c.b16 %v998, %v997
        %v1017 = vpack.c.b16 %v1000, %v999
        %v1018 = vpack.c.b16 %v1002, %v1001
        %1035 = vmatprep.subr.bf16.mxu0 0
        %1036 = vmatpush1.bf16.xpose.msra.mxu0 %v1010
        %1037 = vmatprep.subr.bf16.mxu0 0
        %1038 = vmatpush1.bf16.xpose.msra.mxu0 %v1009
        %1039 = vmatprep.subr.bf16.mxu0 0
        %1040 = vmatpush1.bf16.xpose.msra.mxu0 %v1008
        %1041 = vmatprep.subr.bf16.mxu0 0
        %1042 = vmatpush1.bf16.xpose.msra.mxu0 %v1007
        %1043 = vmatprep.subr.bf16.mxu0 0
        %1044 = vmatpush1.bf16.xpose.msra.mxu0 %v1006
        %1045 = vmatprep.subr.bf16.mxu0 0
        %1046 = vmatpush1.bf16.xpose.msra.mxu0 %v1005
        %1047 = vmatprep.subr.bf16.mxu0 0
        %1048 = vmatpush1.bf16.xpose.msra.mxu0 %v1004
        %1049 = vmatprep.subr.bf16.mxu0 0
        %1050 = vmatpush1.bf16.xpose.msra.mxu0 %v1003
        %1051 = vmatprep.subr.bf16.mxu0 0
        %1052 = vmatpush2.bf16.xpose.msra.mxu0 %v1018
        %1053 = vmatprep.subr.bf16.mxu0 0
        %1054 = vmatpush2.bf16.xpose.msra.mxu0 %v1017
        %1055 = vmatprep.subr.bf16.mxu0 0
        %1056 = vmatpush2.bf16.xpose.msra.mxu0 %v1016
        %1057 = vmatprep.subr.bf16.mxu0 0
        %1058 = vmatpush2.bf16.xpose.msra.mxu0 %v1015
        %1059 = vmatprep.subr.bf16.mxu0 0
        %1060 = vmatpush2.bf16.xpose.msra.mxu0 %v1014
        %1061 = vmatprep.subr.bf16.mxu0 0
        %1062 = vmatpush2.bf16.xpose.msra.mxu0 %v1013
        %1063 = vmatprep.subr.bf16.mxu0 0
        %1064 = vmatpush2.bf16.xpose.msra.mxu0 %v1012
        %1065 = vmatprep.subr.bf16.mxu0 0
        %1066 = vmatpush2.bf16.xpose.msra.mxu0 %v1011
        %1067 = vmatprep.mubr.bf16.mxu0 0
        %1068 = vmatmul.mubr.bf16.gmra.mxu0 %v907
        %v1069 = vpop.f32.mrf.mxu0
        %v1070 = vadd.f32 0.0, %v1069
        %v1071 = vpop.f32.mrf.mxu0
        %v1072 = vadd.f32 0.0, %v1071
        %v1073 = vpop.f32.mrf.mxu0
        %v1074 = vadd.f32 0.0, %v1073
        %v1075 = vpop.f32.mrf.mxu0
        %v1076 = vadd.f32 0.0, %v1075
        %1077 = vmatprep.mubr.bf16.mxu0 0
        %1078 = vmatmul.mubr.bf16.gmra.mxu0 %v908
        %v1079 = vpop.f32.mrf.mxu0
        %v1080 = vadd.f32 0.0, %v1079
        %v1081 = vpop.f32.mrf.mxu0
        %v1082 = vadd.f32 0.0, %v1081
        %v1083 = vpop.f32.mrf.mxu0
        %v1084 = vadd.f32 0.0, %v1083
        %v1085 = vpop.f32.mrf.mxu0
        %v1086 = vadd.f32 0.0, %v1085
        %1087 = vmatprep.mubr.bf16.mxu0 0
        %1088 = vmatmul.mubr.bf16.gmra.mxu0 %v909
        %v1089 = vpop.f32.mrf.mxu0
        %v1090 = vadd.f32 0.0, %v1089
        %v1091 = vpop.f32.mrf.mxu0
        %v1092 = vadd.f32 0.0, %v1091
        %v1093 = vpop.f32.mrf.mxu0
        %v1094 = vadd.f32 0.0, %v1093
        %v1095 = vpop.f32.mrf.mxu0
        %v1096 = vadd.f32 0.0, %v1095
        %1097 = vmatprep.mubr.bf16.mxu0 0
        %1098 = vmatmul.mubr.bf16.gmra.mxu0 %v910
        %v1099 = vpop.f32.mrf.mxu0
        %v1100 = vadd.f32 0.0, %v1099
        %v1101 = vpop.f32.mrf.mxu0
        %v1102 = vadd.f32 0.0, %v1101
        %v1103 = vpop.f32.mrf.mxu0
        %v1104 = vadd.f32 0.0, %v1103
        %v1105 = vpop.f32.mrf.mxu0
        %v1106 = vadd.f32 0.0, %v1105
        %1107 = vmatprep.mubr.bf16.mxu0 0
        %1108 = vmatmul.mubr.bf16.gmra.mxu0 %v911
        %v1109 = vpop.f32.mrf.mxu0
        %v1110 = vadd.f32 0.0, %v1109
        %v1111 = vpop.f32.mrf.mxu0
        %v1112 = vadd.f32 0.0, %v1111
        %v1113 = vpop.f32.mrf.mxu0
        %v1114 = vadd.f32 0.0, %v1113
        %v1115 = vpop.f32.mrf.mxu0
        %v1116 = vadd.f32 0.0, %v1115
        %1117 = vmatprep.mubr.bf16.mxu0 0
        %1118 = vmatmul.mubr.bf16.gmra.mxu0 %v912
        %v1119 = vpop.f32.mrf.mxu0
        %v1120 = vadd.f32 0.0, %v1119
        %v1121 = vpop.f32.mrf.mxu0
        %v1122 = vadd.f32 0.0, %v1121
        %v1123 = vpop.f32.mrf.mxu0
        %v1124 = vadd.f32 0.0, %v1123
        %v1125 = vpop.f32.mrf.mxu0
        %v1126 = vadd.f32 0.0, %v1125
        %1127 = vmatprep.mubr.bf16.mxu0 0
        %1128 = vmatmul.mubr.bf16.gmra.mxu0 %v913
        %v1129 = vpop.f32.mrf.mxu0
        %v1130 = vadd.f32 0.0, %v1129
        %v1131 = vpop.f32.mrf.mxu0
        %v1132 = vadd.f32 0.0, %v1131
        %v1133 = vpop.f32.mrf.mxu0
        %v1134 = vadd.f32 0.0, %v1133
        %v1135 = vpop.f32.mrf.mxu0
        %v1136 = vadd.f32 0.0, %v1135
        %1137 = vmatprep.mubr.bf16.mxu0 0
        %1138 = vmatmul.mubr.bf16.gmra.mxu0 %v914
        %v1139 = vpop.f32.mrf.mxu0
        %v1140 = vadd.f32 0.0, %v1139
        %v1141 = vpop.f32.mrf.mxu0
        %v1142 = vadd.f32 0.0, %v1141
        %v1143 = vpop.f32.mrf.mxu0
        %v1144 = vadd.f32 0.0, %v1143
        %v1145 = vpop.f32.mrf.mxu0
        %v1146 = vadd.f32 0.0, %v1145
        %1147 = vmatprep.mubr.bf16.mxu0 0
        %1148 = vmatmul.mubr.bf16.gmra.mxu0 %v915
        %v1149 = vpop.f32.mrf.mxu0
        %v1150 = vadd.f32 0.0, %v1149
        %v1151 = vpop.f32.mrf.mxu0
        %v1152 = vadd.f32 0.0, %v1151
        %v1153 = vpop.f32.mrf.mxu0
        %v1154 = vadd.f32 0.0, %v1153
        %v1155 = vpop.f32.mrf.mxu0
        %v1156 = vadd.f32 0.0, %v1155
        %1157 = vmatprep.mubr.bf16.mxu0 0
        %1158 = vmatmul.mubr.bf16.gmra.mxu0 %v916
        %v1159 = vpop.f32.mrf.mxu0
        %v1160 = vadd.f32 0.0, %v1159
        %v1161 = vpop.f32.mrf.mxu0
        %v1162 = vadd.f32 0.0, %v1161
        %v1163 = vpop.f32.mrf.mxu0
        %v1164 = vadd.f32 0.0, %v1163
        %v1165 = vpop.f32.mrf.mxu0
        %v1166 = vadd.f32 0.0, %v1165
        %1167 = vmatprep.mubr.bf16.mxu0 0
        %1168 = vmatmul.mubr.bf16.gmra.mxu0 %v917
        %v1169 = vpop.f32.mrf.mxu0
        %v1170 = vadd.f32 0.0, %v1169
        %v1171 = vpop.f32.mrf.mxu0
        %v1172 = vadd.f32 0.0, %v1171
        %v1173 = vpop.f32.mrf.mxu0
        %v1174 = vadd.f32 0.0, %v1173
        %v1175 = vpop.f32.mrf.mxu0
        %v1176 = vadd.f32 0.0, %v1175
        %1177 = vmatprep.mubr.bf16.mxu0 0
        %1178 = vmatmul.mubr.bf16.gmra.mxu0 %v918
        %v1179 = vpop.f32.mrf.mxu0
        %v1180 = vadd.f32 0.0, %v1179
        %v1181 = vpop.f32.mrf.mxu0
        %v1182 = vadd.f32 0.0, %v1181
        %v1183 = vpop.f32.mrf.mxu0
        %v1184 = vadd.f32 0.0, %v1183
        %v1185 = vpop.f32.mrf.mxu0
        %v1186 = vadd.f32 0.0, %v1185
        %1187 = vmatprep.mubr.bf16.mxu0 0
        %1188 = vmatmul.mubr.bf16.gmra.mxu0 %v919
        %v1189 = vpop.f32.mrf.mxu0
        %v1190 = vadd.f32 0.0, %v1189
        %v1191 = vpop.f32.mrf.mxu0
        %v1192 = vadd.f32 0.0, %v1191
        %v1193 = vpop.f32.mrf.mxu0
        %v1194 = vadd.f32 0.0, %v1193
        %v1195 = vpop.f32.mrf.mxu0
        %v1196 = vadd.f32 0.0, %v1195
        %1197 = vmatprep.mubr.bf16.mxu0 0
        %1198 = vmatmul.mubr.bf16.gmra.mxu0 %v920
        %v1199 = vpop.f32.mrf.mxu0
        %v1200 = vadd.f32 0.0, %v1199
        %v1201 = vpop.f32.mrf.mxu0
        %v1202 = vadd.f32 0.0, %v1201
        %v1203 = vpop.f32.mrf.mxu0
        %v1204 = vadd.f32 0.0, %v1203
        %v1205 = vpop.f32.mrf.mxu0
        %v1206 = vadd.f32 0.0, %v1205
        %1207 = vmatprep.mubr.bf16.mxu0 0
        %1208 = vmatmul.mubr.bf16.gmra.mxu0 %v921
        %v1209 = vpop.f32.mrf.mxu0
        %v1210 = vadd.f32 0.0, %v1209
        %v1211 = vpop.f32.mrf.mxu0
        %v1212 = vadd.f32 0.0, %v1211
        %v1213 = vpop.f32.mrf.mxu0
        %v1214 = vadd.f32 0.0, %v1213
        %v1215 = vpop.f32.mrf.mxu0
        %v1216 = vadd.f32 0.0, %v1215
        %1217 = vmatprep.mubr.bf16.mxu0 0
        %1218 = vmatmul.mubr.bf16.gmra.mxu0 %v922
        %v1219 = vpop.f32.mrf.mxu0
        %v1220 = vadd.f32 0.0, %v1219
        %v1221 = vpop.f32.mrf.mxu0
        %v1222 = vadd.f32 0.0, %v1221
        %v1223 = vpop.f32.mrf.mxu0
        %v1224 = vadd.f32 0.0, %v1223
        %v1225 = vpop.f32.mrf.mxu0
        %v1226 = vadd.f32 0.0, %v1225
        %1227 = vdwg.mxu0
        %1229 = vset.pattern.permute.xlu0 0
        %1230 = vperm.xlu0 %1229, %v810
        %v1231 = vpop.permute.xlu0 %1230
        %1234 = vset.pattern.permute.xlu0 0
        %1235 = vperm.xlu0 %1234, %v811
        %v1236 = vpop.permute.xlu0 %1235
        %1239 = vset.pattern.permute.xlu0 0
        %1240 = vperm.xlu0 %1239, %v812
        %v1241 = vpop.permute.xlu0 %1240
        %1244 = vset.pattern.permute.xlu0 0
        %1245 = vperm.xlu0 %1244, %v813
        %v1246 = vpop.permute.xlu0 %1245
        %1249 = vset.pattern.permute.xlu0 0
        %1250 = vperm.xlu0 %1249, %v814
        %v1251 = vpop.permute.xlu0 %1250
        %1254 = vset.pattern.permute.xlu0 0
        %1255 = vperm.xlu0 %1254, %v815
        %v1256 = vpop.permute.xlu0 %1255
        %1259 = vset.pattern.permute.xlu0 0
        %1260 = vperm.xlu0 %1259, %v816
        %v1261 = vpop.permute.xlu0 %1260
        %1264 = vset.pattern.permute.xlu0 0
        %1265 = vperm.xlu0 %1264, %v817
        %v1266 = vpop.permute.xlu0 %1265
        %1269 = vset.pattern.permute.xlu0 0
        %1270 = vperm.xlu0 %1269, %v818
        %v1271 = vpop.permute.xlu0 %1270
        %1274 = vset.pattern.permute.xlu0 0
        %1275 = vperm.xlu0 %1274, %v819
        %v1276 = vpop.permute.xlu0 %1275
        %1279 = vset.pattern.permute.xlu0 0
        %1280 = vperm.xlu0 %1279, %v820
        %v1281 = vpop.permute.xlu0 %1280
        %1284 = vset.pattern.permute.xlu0 0
        %1285 = vperm.xlu0 %1284, %v821
        %v1286 = vpop.permute.xlu0 %1285
        %1289 = vset.pattern.permute.xlu0 0
        %1290 = vperm.xlu0 %1289, %v822
        %v1291 = vpop.permute.xlu0 %1290
        %1294 = vset.pattern.permute.xlu0 0
        %1295 = vperm.xlu0 %1294, %v823
        %v1296 = vpop.permute.xlu0 %1295
        %1299 = vset.pattern.permute.xlu0 0
        %1300 = vperm.xlu0 %1299, %v824
        %v1301 = vpop.permute.xlu0 %1300
        %1304 = vset.pattern.permute.xlu0 0
        %1305 = vperm.xlu0 %1304, %v825
        %v1306 = vpop.permute.xlu0 %1305
        %1309 = vset.pattern.permute.xlu0 0
        %1310 = vperm.xlu0 %1309, %v826
        %v1311 = vpop.permute.xlu0 %1310
        %1314 = vset.pattern.permute.xlu0 0
        %1315 = vperm.xlu0 %1314, %v827
        %v1316 = vpop.permute.xlu0 %1315
        %1319 = vset.pattern.permute.xlu0 0
        %1320 = vperm.xlu0 %1319, %v828
        %v1321 = vpop.permute.xlu0 %1320
        %1324 = vset.pattern.permute.xlu0 0
        %1325 = vperm.xlu0 %1324, %v829
        %v1326 = vpop.permute.xlu0 %1325
        %1329 = vset.pattern.permute.xlu0 0
        %1330 = vperm.xlu0 %1329, %v830
        %v1331 = vpop.permute.xlu0 %1330
        %1334 = vset.pattern.permute.xlu0 0
        %1335 = vperm.xlu0 %1334, %v831
        %v1336 = vpop.permute.xlu0 %1335
        %1339 = vset.pattern.permute.xlu0 0
        %1340 = vperm.xlu0 %1339, %v832
        %v1341 = vpop.permute.xlu0 %1340
        %1344 = vset.pattern.permute.xlu0 0
        %1345 = vperm.xlu0 %1344, %v833
        %v1346 = vpop.permute.xlu0 %1345
        %1349 = vset.pattern.permute.xlu0 0
        %1350 = vperm.xlu0 %1349, %v834
        %v1351 = vpop.permute.xlu0 %1350
        %1354 = vset.pattern.permute.xlu0 0
        %1355 = vperm.xlu0 %1354, %v835
        %v1356 = vpop.permute.xlu0 %1355
        %1359 = vset.pattern.permute.xlu0 0
        %1360 = vperm.xlu0 %1359, %v836
        %v1361 = vpop.permute.xlu0 %1360
        %1364 = vset.pattern.permute.xlu0 0
        %1365 = vperm.xlu0 %1364, %v837
        %v1366 = vpop.permute.xlu0 %1365
        %1369 = vset.pattern.permute.xlu0 0
        %1370 = vperm.xlu0 %1369, %v838
        %v1371 = vpop.permute.xlu0 %1370
        %1374 = vset.pattern.permute.xlu0 0
        %1375 = vperm.xlu0 %1374, %v839
        %v1376 = vpop.permute.xlu0 %1375
        %1379 = vset.pattern.permute.xlu0 0
        %1380 = vperm.xlu0 %1379, %v840
        %v1381 = vpop.permute.xlu0 %1380
        %1384 = vset.pattern.permute.xlu0 0
        %1385 = vperm.xlu0 %1384, %v841
        %v1386 = vpop.permute.xlu0 %1385
        %v1389 = vlaneseq
        %v1390 = vshrl.u32 %v1389, 7
        %v1391 = vsub.s32 0, %v1390
        %v1392 = vrot.slane %v842, %v1391
        %v1393 = vlaneseq
        %v1394 = vshrl.u32 %v1393, 7
        %v1395 = vsub.s32 1, %v1394
        %v1396 = vrot.slane %v842, %v1395
        %v1399 = vadd.f32 %v1231, %v1392
        %v1400 = vadd.f32 %v1231, %v1396
        %v1401 = vadd.f32 %v1236, %v1392
        %v1402 = vadd.f32 %v1236, %v1396
        %v1403 = vadd.f32 %v1241, %v1392
        %v1404 = vadd.f32 %v1241, %v1396
        %v1405 = vadd.f32 %v1246, %v1392
        %v1406 = vadd.f32 %v1246, %v1396
        %v1407 = vadd.f32 %v1251, %v1392
        %v1408 = vadd.f32 %v1251, %v1396
        %v1409 = vadd.f32 %v1256, %v1392
        %v1410 = vadd.f32 %v1256, %v1396
        %v1411 = vadd.f32 %v1261, %v1392
        %v1412 = vadd.f32 %v1261, %v1396
        %v1413 = vadd.f32 %v1266, %v1392
        %v1414 = vadd.f32 %v1266, %v1396
        %v1415 = vadd.f32 %v1271, %v1392
        %v1416 = vadd.f32 %v1271, %v1396
        %v1417 = vadd.f32 %v1276, %v1392
        %v1418 = vadd.f32 %v1276, %v1396
        %v1419 = vadd.f32 %v1281, %v1392
        %v1420 = vadd.f32 %v1281, %v1396
        %v1421 = vadd.f32 %v1286, %v1392
        %v1422 = vadd.f32 %v1286, %v1396
        %v1423 = vadd.f32 %v1291, %v1392
        %v1424 = vadd.f32 %v1291, %v1396
        %v1425 = vadd.f32 %v1296, %v1392
        %v1426 = vadd.f32 %v1296, %v1396
        %v1427 = vadd.f32 %v1301, %v1392
        %v1428 = vadd.f32 %v1301, %v1396
        %v1429 = vadd.f32 %v1306, %v1392
        %v1430 = vadd.f32 %v1306, %v1396
        %v1431 = vadd.f32 %v1311, %v1392
        %v1432 = vadd.f32 %v1311, %v1396
        %v1433 = vadd.f32 %v1316, %v1392
        %v1434 = vadd.f32 %v1316, %v1396
        %v1435 = vadd.f32 %v1321, %v1392
        %v1436 = vadd.f32 %v1321, %v1396
        %v1437 = vadd.f32 %v1326, %v1392
        %v1438 = vadd.f32 %v1326, %v1396
        %v1439 = vadd.f32 %v1331, %v1392
        %v1440 = vadd.f32 %v1331, %v1396
        %v1441 = vadd.f32 %v1336, %v1392
        %v1442 = vadd.f32 %v1336, %v1396
        %v1443 = vadd.f32 %v1341, %v1392
        %v1444 = vadd.f32 %v1341, %v1396
        %v1445 = vadd.f32 %v1346, %v1392
        %v1446 = vadd.f32 %v1346, %v1396
        %v1447 = vadd.f32 %v1351, %v1392
        %v1448 = vadd.f32 %v1351, %v1396
        %v1449 = vadd.f32 %v1356, %v1392
        %v1450 = vadd.f32 %v1356, %v1396
        %v1451 = vadd.f32 %v1361, %v1392
        %v1452 = vadd.f32 %v1361, %v1396
        %v1453 = vadd.f32 %v1366, %v1392
        %v1454 = vadd.f32 %v1366, %v1396
        %v1455 = vadd.f32 %v1371, %v1392
        %v1456 = vadd.f32 %v1371, %v1396
        %v1457 = vadd.f32 %v1376, %v1392
        %v1458 = vadd.f32 %v1376, %v1396
        %v1459 = vadd.f32 %v1381, %v1392
        %v1460 = vadd.f32 %v1381, %v1396
        %v1461 = vadd.f32 %v1386, %v1392
        %v1462 = vadd.f32 %v1386, %v1396
        %v1463 = vmul.f32 %v1070, 2.0
        %v1464 = vmul.f32 %v1072, 2.0
        %v1465 = vmul.f32 %v1074, 2.0
        %v1466 = vmul.f32 %v1076, 2.0
        %v1467 = vmul.f32 %v1080, 2.0
        %v1468 = vmul.f32 %v1082, 2.0
        %v1469 = vmul.f32 %v1084, 2.0
        %v1470 = vmul.f32 %v1086, 2.0
        %v1471 = vmul.f32 %v1090, 2.0
        %v1472 = vmul.f32 %v1092, 2.0
        %v1473 = vmul.f32 %v1094, 2.0
        %v1474 = vmul.f32 %v1096, 2.0
        %v1475 = vmul.f32 %v1100, 2.0
        %v1476 = vmul.f32 %v1102, 2.0
        %v1477 = vmul.f32 %v1104, 2.0
        %v1478 = vmul.f32 %v1106, 2.0
        %v1479 = vmul.f32 %v1110, 2.0
        %v1480 = vmul.f32 %v1112, 2.0
        %v1481 = vmul.f32 %v1114, 2.0
        %v1482 = vmul.f32 %v1116, 2.0
        %v1483 = vmul.f32 %v1120, 2.0
        %v1484 = vmul.f32 %v1122, 2.0
        %v1485 = vmul.f32 %v1124, 2.0
        %v1486 = vmul.f32 %v1126, 2.0
        %v1487 = vmul.f32 %v1130, 2.0
        %v1488 = vmul.f32 %v1132, 2.0
        %v1489 = vmul.f32 %v1134, 2.0
        %v1490 = vmul.f32 %v1136, 2.0
        %v1491 = vmul.f32 %v1140, 2.0
        %v1492 = vmul.f32 %v1142, 2.0
        %v1493 = vmul.f32 %v1144, 2.0
        %v1494 = vmul.f32 %v1146, 2.0
        %v1495 = vmul.f32 %v1150, 2.0
        %v1496 = vmul.f32 %v1152, 2.0
        %v1497 = vmul.f32 %v1154, 2.0
        %v1498 = vmul.f32 %v1156, 2.0
        %v1499 = vmul.f32 %v1160, 2.0
        %v1500 = vmul.f32 %v1162, 2.0
        %v1501 = vmul.f32 %v1164, 2.0
        %v1502 = vmul.f32 %v1166, 2.0
        %v1503 = vmul.f32 %v1170, 2.0
        %v1504 = vmul.f32 %v1172, 2.0
        %v1505 = vmul.f32 %v1174, 2.0
        %v1506 = vmul.f32 %v1176, 2.0
        %v1507 = vmul.f32 %v1180, 2.0
        %v1508 = vmul.f32 %v1182, 2.0
        %v1509 = vmul.f32 %v1184, 2.0
        %v1510 = vmul.f32 %v1186, 2.0
        %v1511 = vmul.f32 %v1190, 2.0
        %v1512 = vmul.f32 %v1192, 2.0
        %v1513 = vmul.f32 %v1194, 2.0
        %v1514 = vmul.f32 %v1196, 2.0
        %v1515 = vmul.f32 %v1200, 2.0
        %v1516 = vmul.f32 %v1202, 2.0
        %v1517 = vmul.f32 %v1204, 2.0
        %v1518 = vmul.f32 %v1206, 2.0
        %v1519 = vmul.f32 %v1210, 2.0
        %v1520 = vmul.f32 %v1212, 2.0
        %v1521 = vmul.f32 %v1214, 2.0
        %v1522 = vmul.f32 %v1216, 2.0
        %v1523 = vmul.f32 %v1220, 2.0
        %v1524 = vmul.f32 %v1222, 2.0
        %v1525 = vmul.f32 %v1224, 2.0
        %v1526 = vmul.f32 %v1226, 2.0
        %v1527 = vsub.f32 %v1399, %v1463
        %v1528 = vsub.f32 %v1400, %v1464
        %v1529 = vsub.f32 %v1401, %v1465
        %v1530 = vsub.f32 %v1402, %v1466
        %v1531 = vsub.f32 %v1403, %v1467
        %v1532 = vsub.f32 %v1404, %v1468
        %v1533 = vsub.f32 %v1405, %v1469
        %v1534 = vsub.f32 %v1406, %v1470
        %v1535 = vsub.f32 %v1407, %v1471
        %v1536 = vsub.f32 %v1408, %v1472
        %v1537 = vsub.f32 %v1409, %v1473
        %v1538 = vsub.f32 %v1410, %v1474
        %v1539 = vsub.f32 %v1411, %v1475
        %v1540 = vsub.f32 %v1412, %v1476
        %v1541 = vsub.f32 %v1413, %v1477
        %v1542 = vsub.f32 %v1414, %v1478
        %v1543 = vsub.f32 %v1415, %v1479
        %v1544 = vsub.f32 %v1416, %v1480
        %v1545 = vsub.f32 %v1417, %v1481
        %v1546 = vsub.f32 %v1418, %v1482
        %v1547 = vsub.f32 %v1419, %v1483
        %v1548 = vsub.f32 %v1420, %v1484
        %v1549 = vsub.f32 %v1421, %v1485
        %v1550 = vsub.f32 %v1422, %v1486
        %v1551 = vsub.f32 %v1423, %v1487
        %v1552 = vsub.f32 %v1424, %v1488
        %v1553 = vsub.f32 %v1425, %v1489
        %v1554 = vsub.f32 %v1426, %v1490
        %v1555 = vsub.f32 %v1427, %v1491
        %v1556 = vsub.f32 %v1428, %v1492
        %v1557 = vsub.f32 %v1429, %v1493
        %v1558 = vsub.f32 %v1430, %v1494
        %v1559 = vsub.f32 %v1431, %v1495
        %v1560 = vsub.f32 %v1432, %v1496
        %v1561 = vsub.f32 %v1433, %v1497
        %v1562 = vsub.f32 %v1434, %v1498
        %v1563 = vsub.f32 %v1435, %v1499
        %v1564 = vsub.f32 %v1436, %v1500
        %v1565 = vsub.f32 %v1437, %v1501
        %v1566 = vsub.f32 %v1438, %v1502
        %v1567 = vsub.f32 %v1439, %v1503
        %v1568 = vsub.f32 %v1440, %v1504
        %v1569 = vsub.f32 %v1441, %v1505
        %v1570 = vsub.f32 %v1442, %v1506
        %v1571 = vsub.f32 %v1443, %v1507
        %v1572 = vsub.f32 %v1444, %v1508
        %v1573 = vsub.f32 %v1445, %v1509
        %v1574 = vsub.f32 %v1446, %v1510
        %v1575 = vsub.f32 %v1447, %v1511
        %v1576 = vsub.f32 %v1448, %v1512
        %v1577 = vsub.f32 %v1449, %v1513
        %v1578 = vsub.f32 %v1450, %v1514
        %v1579 = vsub.f32 %v1451, %v1515
        %v1580 = vsub.f32 %v1452, %v1516
        %v1581 = vsub.f32 %v1453, %v1517
        %v1582 = vsub.f32 %v1454, %v1518
        %v1583 = vsub.f32 %v1455, %v1519
        %v1584 = vsub.f32 %v1456, %v1520
        %v1585 = vsub.f32 %v1457, %v1521
        %v1586 = vsub.f32 %v1458, %v1522
        %v1587 = vsub.f32 %v1459, %v1523
        %v1588 = vsub.f32 %v1460, %v1524
        %v1589 = vsub.f32 %v1461, %v1525
        %v1590 = vsub.f32 %v1462, %v1526
        %v1591 = vmax.f32 %v1527, 0.0
        %v1592 = vmax.f32 %v1528, 0.0
        %v1593 = vmax.f32 %v1529, 0.0
        %v1594 = vmax.f32 %v1530, 0.0
        %v1595 = vmax.f32 %v1531, 0.0
        %v1596 = vmax.f32 %v1532, 0.0
        %v1597 = vmax.f32 %v1533, 0.0
        %v1598 = vmax.f32 %v1534, 0.0
        %v1599 = vmax.f32 %v1535, 0.0
        %v1600 = vmax.f32 %v1536, 0.0
        %v1601 = vmax.f32 %v1537, 0.0
        %v1602 = vmax.f32 %v1538, 0.0
        %v1603 = vmax.f32 %v1539, 0.0
        %v1604 = vmax.f32 %v1540, 0.0
        %v1605 = vmax.f32 %v1541, 0.0
        %v1606 = vmax.f32 %v1542, 0.0
        %v1607 = vmax.f32 %v1543, 0.0
        %v1608 = vmax.f32 %v1544, 0.0
        %v1609 = vmax.f32 %v1545, 0.0
        %v1610 = vmax.f32 %v1546, 0.0
        %v1611 = vmax.f32 %v1547, 0.0
        %v1612 = vmax.f32 %v1548, 0.0
        %v1613 = vmax.f32 %v1549, 0.0
        %v1614 = vmax.f32 %v1550, 0.0
        %v1615 = vmax.f32 %v1551, 0.0
        %v1616 = vmax.f32 %v1552, 0.0
        %v1617 = vmax.f32 %v1553, 0.0
        %v1618 = vmax.f32 %v1554, 0.0
        %v1619 = vmax.f32 %v1555, 0.0
        %v1620 = vmax.f32 %v1556, 0.0
        %v1621 = vmax.f32 %v1557, 0.0
        %v1622 = vmax.f32 %v1558, 0.0
        %v1623 = vmax.f32 %v1559, 0.0
        %v1624 = vmax.f32 %v1560, 0.0
        %v1625 = vmax.f32 %v1561, 0.0
        %v1626 = vmax.f32 %v1562, 0.0
        %v1627 = vmax.f32 %v1563, 0.0
        %v1628 = vmax.f32 %v1564, 0.0
        %v1629 = vmax.f32 %v1565, 0.0
        %v1630 = vmax.f32 %v1566, 0.0
        %v1631 = vmax.f32 %v1567, 0.0
        %v1632 = vmax.f32 %v1568, 0.0
        %v1633 = vmax.f32 %v1569, 0.0
        %v1634 = vmax.f32 %v1570, 0.0
        %v1635 = vmax.f32 %v1571, 0.0
        %v1636 = vmax.f32 %v1572, 0.0
        %v1637 = vmax.f32 %v1573, 0.0
        %v1638 = vmax.f32 %v1574, 0.0
        %v1639 = vmax.f32 %v1575, 0.0
        %v1640 = vmax.f32 %v1576, 0.0
        %v1641 = vmax.f32 %v1577, 0.0
        %v1642 = vmax.f32 %v1578, 0.0
        %v1643 = vmax.f32 %v1579, 0.0
        %v1644 = vmax.f32 %v1580, 0.0
        %v1645 = vmax.f32 %v1581, 0.0
        %v1646 = vmax.f32 %v1582, 0.0
        %v1647 = vmax.f32 %v1583, 0.0
        %v1648 = vmax.f32 %v1584, 0.0
        %v1649 = vmax.f32 %v1585, 0.0
        %v1650 = vmax.f32 %v1586, 0.0
        %v1651 = vmax.f32 %v1587, 0.0
        %v1652 = vmax.f32 %v1588, 0.0
        %v1653 = vmax.f32 %v1589, 0.0
        %v1654 = vmax.f32 %v1590, 0.0
        %v1655 = vrsqrt.pop %v1591
        %v1656 = vmul.f32 %v1591, %v1655
        %vm1657 = vcmp.eq.f32.partialorder %v1591, inf
        %v1658 = vsel %vm1657, %v1591, %v1656
        %vm1659 = vcmp.eq.f32.partialorder %v1591, 0.0
        %v1660 = vand.u32 %v1591, 2147483648
        %v1661 = vsel %vm1659, %v1660, %v1658
        %v1662 = vrsqrt.pop %v1592
        %v1663 = vmul.f32 %v1592, %v1662
        %vm1664 = vcmp.eq.f32.partialorder %v1592, inf
        %v1665 = vsel %vm1664, %v1592, %v1663
        %vm1666 = vcmp.eq.f32.partialorder %v1592, 0.0
        %v1667 = vand.u32 %v1592, 2147483648
        %v1668 = vsel %vm1666, %v1667, %v1665
        %v1669 = vrsqrt.pop %v1593
        %v1670 = vmul.f32 %v1593, %v1669
        %vm1671 = vcmp.eq.f32.partialorder %v1593, inf
        %v1672 = vsel %vm1671, %v1593, %v1670
        %vm1673 = vcmp.eq.f32.partialorder %v1593, 0.0
        %v1674 = vand.u32 %v1593, 2147483648
        %v1675 = vsel %vm1673, %v1674, %v1672
        %v1676 = vrsqrt.pop %v1594
        %v1677 = vmul.f32 %v1594, %v1676
        %vm1678 = vcmp.eq.f32.partialorder %v1594, inf
        %v1679 = vsel %vm1678, %v1594, %v1677
        %vm1680 = vcmp.eq.f32.partialorder %v1594, 0.0
        %v1681 = vand.u32 %v1594, 2147483648
        %v1682 = vsel %vm1680, %v1681, %v1679
        %v1683 = vrsqrt.pop %v1595
        %v1684 = vmul.f32 %v1595, %v1683
        %vm1685 = vcmp.eq.f32.partialorder %v1595, inf
        %v1686 = vsel %vm1685, %v1595, %v1684
        %vm1687 = vcmp.eq.f32.partialorder %v1595, 0.0
        %v1688 = vand.u32 %v1595, 2147483648
        %v1689 = vsel %vm1687, %v1688, %v1686
        %v1690 = vrsqrt.pop %v1596
        %v1691 = vmul.f32 %v1596, %v1690
        %vm1692 = vcmp.eq.f32.partialorder %v1596, inf
        %v1693 = vsel %vm1692, %v1596, %v1691
        %vm1694 = vcmp.eq.f32.partialorder %v1596, 0.0
        %v1695 = vand.u32 %v1596, 2147483648
        %v1696 = vsel %vm1694, %v1695, %v1693
        %v1697 = vrsqrt.pop %v1597
        %v1698 = vmul.f32 %v1597, %v1697
        %vm1699 = vcmp.eq.f32.partialorder %v1597, inf
        %v1700 = vsel %vm1699, %v1597, %v1698
        %vm1701 = vcmp.eq.f32.partialorder %v1597, 0.0
        %v1702 = vand.u32 %v1597, 2147483648
        %v1703 = vsel %vm1701, %v1702, %v1700
        %v1704 = vrsqrt.pop %v1598
        %v1705 = vmul.f32 %v1598, %v1704
        %vm1706 = vcmp.eq.f32.partialorder %v1598, inf
        %v1707 = vsel %vm1706, %v1598, %v1705
        %vm1708 = vcmp.eq.f32.partialorder %v1598, 0.0
        %v1709 = vand.u32 %v1598, 2147483648
        %v1710 = vsel %vm1708, %v1709, %v1707
        %v1711 = vrsqrt.pop %v1599
        %v1712 = vmul.f32 %v1599, %v1711
        %vm1713 = vcmp.eq.f32.partialorder %v1599, inf
        %v1714 = vsel %vm1713, %v1599, %v1712
        %vm1715 = vcmp.eq.f32.partialorder %v1599, 0.0
        %v1716 = vand.u32 %v1599, 2147483648
        %v1717 = vsel %vm1715, %v1716, %v1714
        %v1718 = vrsqrt.pop %v1600
        %v1719 = vmul.f32 %v1600, %v1718
        %vm1720 = vcmp.eq.f32.partialorder %v1600, inf
        %v1721 = vsel %vm1720, %v1600, %v1719
        %vm1722 = vcmp.eq.f32.partialorder %v1600, 0.0
        %v1723 = vand.u32 %v1600, 2147483648
        %v1724 = vsel %vm1722, %v1723, %v1721
        %v1725 = vrsqrt.pop %v1601
        %v1726 = vmul.f32 %v1601, %v1725
        %vm1727 = vcmp.eq.f32.partialorder %v1601, inf
        %v1728 = vsel %vm1727, %v1601, %v1726
        %vm1729 = vcmp.eq.f32.partialorder %v1601, 0.0
        %v1730 = vand.u32 %v1601, 2147483648
        %v1731 = vsel %vm1729, %v1730, %v1728
        %v1732 = vrsqrt.pop %v1602
        %v1733 = vmul.f32 %v1602, %v1732
        %vm1734 = vcmp.eq.f32.partialorder %v1602, inf
        %v1735 = vsel %vm1734, %v1602, %v1733
        %vm1736 = vcmp.eq.f32.partialorder %v1602, 0.0
        %v1737 = vand.u32 %v1602, 2147483648
        %v1738 = vsel %vm1736, %v1737, %v1735
        %v1739 = vrsqrt.pop %v1603
        %v1740 = vmul.f32 %v1603, %v1739
        %vm1741 = vcmp.eq.f32.partialorder %v1603, inf
        %v1742 = vsel %vm1741, %v1603, %v1740
        %vm1743 = vcmp.eq.f32.partialorder %v1603, 0.0
        %v1744 = vand.u32 %v1603, 2147483648
        %v1745 = vsel %vm1743, %v1744, %v1742
        %v1746 = vrsqrt.pop %v1604
        %v1747 = vmul.f32 %v1604, %v1746
        %vm1748 = vcmp.eq.f32.partialorder %v1604, inf
        %v1749 = vsel %vm1748, %v1604, %v1747
        %vm1750 = vcmp.eq.f32.partialorder %v1604, 0.0
        %v1751 = vand.u32 %v1604, 2147483648
        %v1752 = vsel %vm1750, %v1751, %v1749
        %v1753 = vrsqrt.pop %v1605
        %v1754 = vmul.f32 %v1605, %v1753
        %vm1755 = vcmp.eq.f32.partialorder %v1605, inf
        %v1756 = vsel %vm1755, %v1605, %v1754
        %vm1757 = vcmp.eq.f32.partialorder %v1605, 0.0
        %v1758 = vand.u32 %v1605, 2147483648
        %v1759 = vsel %vm1757, %v1758, %v1756
        %v1760 = vrsqrt.pop %v1606
        %v1761 = vmul.f32 %v1606, %v1760
        %vm1762 = vcmp.eq.f32.partialorder %v1606, inf
        %v1763 = vsel %vm1762, %v1606, %v1761
        %vm1764 = vcmp.eq.f32.partialorder %v1606, 0.0
        %v1765 = vand.u32 %v1606, 2147483648
        %v1766 = vsel %vm1764, %v1765, %v1763
        %v1767 = vrsqrt.pop %v1607
        %v1768 = vmul.f32 %v1607, %v1767
        %vm1769 = vcmp.eq.f32.partialorder %v1607, inf
        %v1770 = vsel %vm1769, %v1607, %v1768
        %vm1771 = vcmp.eq.f32.partialorder %v1607, 0.0
        %v1772 = vand.u32 %v1607, 2147483648
        %v1773 = vsel %vm1771, %v1772, %v1770
        %v1774 = vrsqrt.pop %v1608
        %v1775 = vmul.f32 %v1608, %v1774
        %vm1776 = vcmp.eq.f32.partialorder %v1608, inf
        %v1777 = vsel %vm1776, %v1608, %v1775
        %vm1778 = vcmp.eq.f32.partialorder %v1608, 0.0
        %v1779 = vand.u32 %v1608, 2147483648
        %v1780 = vsel %vm1778, %v1779, %v1777
        %v1781 = vrsqrt.pop %v1609
        %v1782 = vmul.f32 %v1609, %v1781
        %vm1783 = vcmp.eq.f32.partialorder %v1609, inf
        %v1784 = vsel %vm1783, %v1609, %v1782
        %vm1785 = vcmp.eq.f32.partialorder %v1609, 0.0
        %v1786 = vand.u32 %v1609, 2147483648
        %v1787 = vsel %vm1785, %v1786, %v1784
        %v1788 = vrsqrt.pop %v1610
        %v1789 = vmul.f32 %v1610, %v1788
        %vm1790 = vcmp.eq.f32.partialorder %v1610, inf
        %v1791 = vsel %vm1790, %v1610, %v1789
        %vm1792 = vcmp.eq.f32.partialorder %v1610, 0.0
        %v1793 = vand.u32 %v1610, 2147483648
        %v1794 = vsel %vm1792, %v1793, %v1791
        %v1795 = vrsqrt.pop %v1611
        %v1796 = vmul.f32 %v1611, %v1795
        %vm1797 = vcmp.eq.f32.partialorder %v1611, inf
        %v1798 = vsel %vm1797, %v1611, %v1796
        %vm1799 = vcmp.eq.f32.partialorder %v1611, 0.0
        %v1800 = vand.u32 %v1611, 2147483648
        %v1801 = vsel %vm1799, %v1800, %v1798
        %v1802 = vrsqrt.pop %v1612
        %v1803 = vmul.f32 %v1612, %v1802
        %vm1804 = vcmp.eq.f32.partialorder %v1612, inf
        %v1805 = vsel %vm1804, %v1612, %v1803
        %vm1806 = vcmp.eq.f32.partialorder %v1612, 0.0
        %v1807 = vand.u32 %v1612, 2147483648
        %v1808 = vsel %vm1806, %v1807, %v1805
        %v1809 = vrsqrt.pop %v1613
        %v1810 = vmul.f32 %v1613, %v1809
        %vm1811 = vcmp.eq.f32.partialorder %v1613, inf
        %v1812 = vsel %vm1811, %v1613, %v1810
        %vm1813 = vcmp.eq.f32.partialorder %v1613, 0.0
        %v1814 = vand.u32 %v1613, 2147483648
        %v1815 = vsel %vm1813, %v1814, %v1812
        %v1816 = vrsqrt.pop %v1614
        %v1817 = vmul.f32 %v1614, %v1816
        %vm1818 = vcmp.eq.f32.partialorder %v1614, inf
        %v1819 = vsel %vm1818, %v1614, %v1817
        %vm1820 = vcmp.eq.f32.partialorder %v1614, 0.0
        %v1821 = vand.u32 %v1614, 2147483648
        %v1822 = vsel %vm1820, %v1821, %v1819
        %v1823 = vrsqrt.pop %v1615
        %v1824 = vmul.f32 %v1615, %v1823
        %vm1825 = vcmp.eq.f32.partialorder %v1615, inf
        %v1826 = vsel %vm1825, %v1615, %v1824
        %vm1827 = vcmp.eq.f32.partialorder %v1615, 0.0
        %v1828 = vand.u32 %v1615, 2147483648
        %v1829 = vsel %vm1827, %v1828, %v1826
        %v1830 = vrsqrt.pop %v1616
        %v1831 = vmul.f32 %v1616, %v1830
        %vm1832 = vcmp.eq.f32.partialorder %v1616, inf
        %v1833 = vsel %vm1832, %v1616, %v1831
        %vm1834 = vcmp.eq.f32.partialorder %v1616, 0.0
        %v1835 = vand.u32 %v1616, 2147483648
        %v1836 = vsel %vm1834, %v1835, %v1833
        %v1837 = vrsqrt.pop %v1617
        %v1838 = vmul.f32 %v1617, %v1837
        %vm1839 = vcmp.eq.f32.partialorder %v1617, inf
        %v1840 = vsel %vm1839, %v1617, %v1838
        %vm1841 = vcmp.eq.f32.partialorder %v1617, 0.0
        %v1842 = vand.u32 %v1617, 2147483648
        %v1843 = vsel %vm1841, %v1842, %v1840
        %v1844 = vrsqrt.pop %v1618
        %v1845 = vmul.f32 %v1618, %v1844
        %vm1846 = vcmp.eq.f32.partialorder %v1618, inf
        %v1847 = vsel %vm1846, %v1618, %v1845
        %vm1848 = vcmp.eq.f32.partialorder %v1618, 0.0
        %v1849 = vand.u32 %v1618, 2147483648
        %v1850 = vsel %vm1848, %v1849, %v1847
        %v1851 = vrsqrt.pop %v1619
        %v1852 = vmul.f32 %v1619, %v1851
        %vm1853 = vcmp.eq.f32.partialorder %v1619, inf
        %v1854 = vsel %vm1853, %v1619, %v1852
        %vm1855 = vcmp.eq.f32.partialorder %v1619, 0.0
        %v1856 = vand.u32 %v1619, 2147483648
        %v1857 = vsel %vm1855, %v1856, %v1854
        %v1858 = vrsqrt.pop %v1620
        %v1859 = vmul.f32 %v1620, %v1858
        %vm1860 = vcmp.eq.f32.partialorder %v1620, inf
        %v1861 = vsel %vm1860, %v1620, %v1859
        %vm1862 = vcmp.eq.f32.partialorder %v1620, 0.0
        %v1863 = vand.u32 %v1620, 2147483648
        %v1864 = vsel %vm1862, %v1863, %v1861
        %v1865 = vrsqrt.pop %v1621
        %v1866 = vmul.f32 %v1621, %v1865
        %vm1867 = vcmp.eq.f32.partialorder %v1621, inf
        %v1868 = vsel %vm1867, %v1621, %v1866
        %vm1869 = vcmp.eq.f32.partialorder %v1621, 0.0
        %v1870 = vand.u32 %v1621, 2147483648
        %v1871 = vsel %vm1869, %v1870, %v1868
        %v1872 = vrsqrt.pop %v1622
        %v1873 = vmul.f32 %v1622, %v1872
        %vm1874 = vcmp.eq.f32.partialorder %v1622, inf
        %v1875 = vsel %vm1874, %v1622, %v1873
        %vm1876 = vcmp.eq.f32.partialorder %v1622, 0.0
        %v1877 = vand.u32 %v1622, 2147483648
        %v1878 = vsel %vm1876, %v1877, %v1875
        %v1879 = vrsqrt.pop %v1623
        %v1880 = vmul.f32 %v1623, %v1879
        %vm1881 = vcmp.eq.f32.partialorder %v1623, inf
        %v1882 = vsel %vm1881, %v1623, %v1880
        %vm1883 = vcmp.eq.f32.partialorder %v1623, 0.0
        %v1884 = vand.u32 %v1623, 2147483648
        %v1885 = vsel %vm1883, %v1884, %v1882
        %v1886 = vrsqrt.pop %v1624
        %v1887 = vmul.f32 %v1624, %v1886
        %vm1888 = vcmp.eq.f32.partialorder %v1624, inf
        %v1889 = vsel %vm1888, %v1624, %v1887
        %vm1890 = vcmp.eq.f32.partialorder %v1624, 0.0
        %v1891 = vand.u32 %v1624, 2147483648
        %v1892 = vsel %vm1890, %v1891, %v1889
        %v1893 = vrsqrt.pop %v1625
        %v1894 = vmul.f32 %v1625, %v1893
        %vm1895 = vcmp.eq.f32.partialorder %v1625, inf
        %v1896 = vsel %vm1895, %v1625, %v1894
        %vm1897 = vcmp.eq.f32.partialorder %v1625, 0.0
        %v1898 = vand.u32 %v1625, 2147483648
        %v1899 = vsel %vm1897, %v1898, %v1896
        %v1900 = vrsqrt.pop %v1626
        %v1901 = vmul.f32 %v1626, %v1900
        %vm1902 = vcmp.eq.f32.partialorder %v1626, inf
        %v1903 = vsel %vm1902, %v1626, %v1901
        %vm1904 = vcmp.eq.f32.partialorder %v1626, 0.0
        %v1905 = vand.u32 %v1626, 2147483648
        %v1906 = vsel %vm1904, %v1905, %v1903
        %v1907 = vrsqrt.pop %v1627
        %v1908 = vmul.f32 %v1627, %v1907
        %vm1909 = vcmp.eq.f32.partialorder %v1627, inf
        %v1910 = vsel %vm1909, %v1627, %v1908
        %vm1911 = vcmp.eq.f32.partialorder %v1627, 0.0
        %v1912 = vand.u32 %v1627, 2147483648
        %v1913 = vsel %vm1911, %v1912, %v1910
        %v1914 = vrsqrt.pop %v1628
        %v1915 = vmul.f32 %v1628, %v1914
        %vm1916 = vcmp.eq.f32.partialorder %v1628, inf
        %v1917 = vsel %vm1916, %v1628, %v1915
        %vm1918 = vcmp.eq.f32.partialorder %v1628, 0.0
        %v1919 = vand.u32 %v1628, 2147483648
        %v1920 = vsel %vm1918, %v1919, %v1917
        %v1921 = vrsqrt.pop %v1629
        %v1922 = vmul.f32 %v1629, %v1921
        %vm1923 = vcmp.eq.f32.partialorder %v1629, inf
        %v1924 = vsel %vm1923, %v1629, %v1922
        %vm1925 = vcmp.eq.f32.partialorder %v1629, 0.0
        %v1926 = vand.u32 %v1629, 2147483648
        %v1927 = vsel %vm1925, %v1926, %v1924
        %v1928 = vrsqrt.pop %v1630
        %v1929 = vmul.f32 %v1630, %v1928
        %vm1930 = vcmp.eq.f32.partialorder %v1630, inf
        %v1931 = vsel %vm1930, %v1630, %v1929
        %vm1932 = vcmp.eq.f32.partialorder %v1630, 0.0
        %v1933 = vand.u32 %v1630, 2147483648
        %v1934 = vsel %vm1932, %v1933, %v1931
        %v1935 = vrsqrt.pop %v1631
        %v1936 = vmul.f32 %v1631, %v1935
        %vm1937 = vcmp.eq.f32.partialorder %v1631, inf
        %v1938 = vsel %vm1937, %v1631, %v1936
        %vm1939 = vcmp.eq.f32.partialorder %v1631, 0.0
        %v1940 = vand.u32 %v1631, 2147483648
        %v1941 = vsel %vm1939, %v1940, %v1938
        %v1942 = vrsqrt.pop %v1632
        %v1943 = vmul.f32 %v1632, %v1942
        %vm1944 = vcmp.eq.f32.partialorder %v1632, inf
        %v1945 = vsel %vm1944, %v1632, %v1943
        %vm1946 = vcmp.eq.f32.partialorder %v1632, 0.0
        %v1947 = vand.u32 %v1632, 2147483648
        %v1948 = vsel %vm1946, %v1947, %v1945
        %v1949 = vrsqrt.pop %v1633
        %v1950 = vmul.f32 %v1633, %v1949
        %vm1951 = vcmp.eq.f32.partialorder %v1633, inf
        %v1952 = vsel %vm1951, %v1633, %v1950
        %vm1953 = vcmp.eq.f32.partialorder %v1633, 0.0
        %v1954 = vand.u32 %v1633, 2147483648
        %v1955 = vsel %vm1953, %v1954, %v1952
        %v1956 = vrsqrt.pop %v1634
        %v1957 = vmul.f32 %v1634, %v1956
        %vm1958 = vcmp.eq.f32.partialorder %v1634, inf
        %v1959 = vsel %vm1958, %v1634, %v1957
        %vm1960 = vcmp.eq.f32.partialorder %v1634, 0.0
        %v1961 = vand.u32 %v1634, 2147483648
        %v1962 = vsel %vm1960, %v1961, %v1959
        %v1963 = vrsqrt.pop %v1635
        %v1964 = vmul.f32 %v1635, %v1963
        %vm1965 = vcmp.eq.f32.partialorder %v1635, inf
        %v1966 = vsel %vm1965, %v1635, %v1964
        %vm1967 = vcmp.eq.f32.partialorder %v1635, 0.0
        %v1968 = vand.u32 %v1635, 2147483648
        %v1969 = vsel %vm1967, %v1968, %v1966
        %v1970 = vrsqrt.pop %v1636
        %v1971 = vmul.f32 %v1636, %v1970
        %vm1972 = vcmp.eq.f32.partialorder %v1636, inf
        %v1973 = vsel %vm1972, %v1636, %v1971
        %vm1974 = vcmp.eq.f32.partialorder %v1636, 0.0
        %v1975 = vand.u32 %v1636, 2147483648
        %v1976 = vsel %vm1974, %v1975, %v1973
        %v1977 = vrsqrt.pop %v1637
        %v1978 = vmul.f32 %v1637, %v1977
        %vm1979 = vcmp.eq.f32.partialorder %v1637, inf
        %v1980 = vsel %vm1979, %v1637, %v1978
        %vm1981 = vcmp.eq.f32.partialorder %v1637, 0.0
        %v1982 = vand.u32 %v1637, 2147483648
        %v1983 = vsel %vm1981, %v1982, %v1980
        %v1984 = vrsqrt.pop %v1638
        %v1985 = vmul.f32 %v1638, %v1984
        %vm1986 = vcmp.eq.f32.partialorder %v1638, inf
        %v1987 = vsel %vm1986, %v1638, %v1985
        %vm1988 = vcmp.eq.f32.partialorder %v1638, 0.0
        %v1989 = vand.u32 %v1638, 2147483648
        %v1990 = vsel %vm1988, %v1989, %v1987
        %v1991 = vrsqrt.pop %v1639
        %v1992 = vmul.f32 %v1639, %v1991
        %vm1993 = vcmp.eq.f32.partialorder %v1639, inf
        %v1994 = vsel %vm1993, %v1639, %v1992
        %vm1995 = vcmp.eq.f32.partialorder %v1639, 0.0
        %v1996 = vand.u32 %v1639, 2147483648
        %v1997 = vsel %vm1995, %v1996, %v1994
        %v1998 = vrsqrt.pop %v1640
        %v1999 = vmul.f32 %v1640, %v1998
        %vm2000 = vcmp.eq.f32.partialorder %v1640, inf
        %v2001 = vsel %vm2000, %v1640, %v1999
        %vm2002 = vcmp.eq.f32.partialorder %v1640, 0.0
        %v2003 = vand.u32 %v1640, 2147483648
        %v2004 = vsel %vm2002, %v2003, %v2001
        %v2005 = vrsqrt.pop %v1641
        %v2006 = vmul.f32 %v1641, %v2005
        %vm2007 = vcmp.eq.f32.partialorder %v1641, inf
        %v2008 = vsel %vm2007, %v1641, %v2006
        %vm2009 = vcmp.eq.f32.partialorder %v1641, 0.0
        %v2010 = vand.u32 %v1641, 2147483648
        %v2011 = vsel %vm2009, %v2010, %v2008
        %v2012 = vrsqrt.pop %v1642
        %v2013 = vmul.f32 %v1642, %v2012
        %vm2014 = vcmp.eq.f32.partialorder %v1642, inf
        %v2015 = vsel %vm2014, %v1642, %v2013
        %vm2016 = vcmp.eq.f32.partialorder %v1642, 0.0
        %v2017 = vand.u32 %v1642, 2147483648
        %v2018 = vsel %vm2016, %v2017, %v2015
        %v2019 = vrsqrt.pop %v1643
        %v2020 = vmul.f32 %v1643, %v2019
        %vm2021 = vcmp.eq.f32.partialorder %v1643, inf
        %v2022 = vsel %vm2021, %v1643, %v2020
        %vm2023 = vcmp.eq.f32.partialorder %v1643, 0.0
        %v2024 = vand.u32 %v1643, 2147483648
        %v2025 = vsel %vm2023, %v2024, %v2022
        %v2026 = vrsqrt.pop %v1644
        %v2027 = vmul.f32 %v1644, %v2026
        %vm2028 = vcmp.eq.f32.partialorder %v1644, inf
        %v2029 = vsel %vm2028, %v1644, %v2027
        %vm2030 = vcmp.eq.f32.partialorder %v1644, 0.0
        %v2031 = vand.u32 %v1644, 2147483648
        %v2032 = vsel %vm2030, %v2031, %v2029
        %v2033 = vrsqrt.pop %v1645
        %v2034 = vmul.f32 %v1645, %v2033
        %vm2035 = vcmp.eq.f32.partialorder %v1645, inf
        %v2036 = vsel %vm2035, %v1645, %v2034
        %vm2037 = vcmp.eq.f32.partialorder %v1645, 0.0
        %v2038 = vand.u32 %v1645, 2147483648
        %v2039 = vsel %vm2037, %v2038, %v2036
        %v2040 = vrsqrt.pop %v1646
        %v2041 = vmul.f32 %v1646, %v2040
        %vm2042 = vcmp.eq.f32.partialorder %v1646, inf
        %v2043 = vsel %vm2042, %v1646, %v2041
        %vm2044 = vcmp.eq.f32.partialorder %v1646, 0.0
        %v2045 = vand.u32 %v1646, 2147483648
        %v2046 = vsel %vm2044, %v2045, %v2043
        %v2047 = vrsqrt.pop %v1647
        %v2048 = vmul.f32 %v1647, %v2047
        %vm2049 = vcmp.eq.f32.partialorder %v1647, inf
        %v2050 = vsel %vm2049, %v1647, %v2048
        %vm2051 = vcmp.eq.f32.partialorder %v1647, 0.0
        %v2052 = vand.u32 %v1647, 2147483648
        %v2053 = vsel %vm2051, %v2052, %v2050
        %v2054 = vrsqrt.pop %v1648
        %v2055 = vmul.f32 %v1648, %v2054
        %vm2056 = vcmp.eq.f32.partialorder %v1648, inf
        %v2057 = vsel %vm2056, %v1648, %v2055
        %vm2058 = vcmp.eq.f32.partialorder %v1648, 0.0
        %v2059 = vand.u32 %v1648, 2147483648
        %v2060 = vsel %vm2058, %v2059, %v2057
        %v2061 = vrsqrt.pop %v1649
        %v2062 = vmul.f32 %v1649, %v2061
        %vm2063 = vcmp.eq.f32.partialorder %v1649, inf
        %v2064 = vsel %vm2063, %v1649, %v2062
        %vm2065 = vcmp.eq.f32.partialorder %v1649, 0.0
        %v2066 = vand.u32 %v1649, 2147483648
        %v2067 = vsel %vm2065, %v2066, %v2064
        %v2068 = vrsqrt.pop %v1650
        %v2069 = vmul.f32 %v1650, %v2068
        %vm2070 = vcmp.eq.f32.partialorder %v1650, inf
        %v2071 = vsel %vm2070, %v1650, %v2069
        %vm2072 = vcmp.eq.f32.partialorder %v1650, 0.0
        %v2073 = vand.u32 %v1650, 2147483648
        %v2074 = vsel %vm2072, %v2073, %v2071
        %v2075 = vrsqrt.pop %v1651
        %v2076 = vmul.f32 %v1651, %v2075
        %vm2077 = vcmp.eq.f32.partialorder %v1651, inf
        %v2078 = vsel %vm2077, %v1651, %v2076
        %vm2079 = vcmp.eq.f32.partialorder %v1651, 0.0
        %v2080 = vand.u32 %v1651, 2147483648
        %v2081 = vsel %vm2079, %v2080, %v2078
        %v2082 = vrsqrt.pop %v1652
        %v2083 = vmul.f32 %v1652, %v2082
        %vm2084 = vcmp.eq.f32.partialorder %v1652, inf
        %v2085 = vsel %vm2084, %v1652, %v2083
        %vm2086 = vcmp.eq.f32.partialorder %v1652, 0.0
        %v2087 = vand.u32 %v1652, 2147483648
        %v2088 = vsel %vm2086, %v2087, %v2085
        %v2089 = vrsqrt.pop %v1653
        %v2090 = vmul.f32 %v1653, %v2089
        %vm2091 = vcmp.eq.f32.partialorder %v1653, inf
        %v2092 = vsel %vm2091, %v1653, %v2090
        %vm2093 = vcmp.eq.f32.partialorder %v1653, 0.0
        %v2094 = vand.u32 %v1653, 2147483648
        %v2095 = vsel %vm2093, %v2094, %v2092
        %v2096 = vrsqrt.pop %v1654
        %v2097 = vmul.f32 %v1654, %v2096
        %vm2098 = vcmp.eq.f32.partialorder %v1654, inf
        %v2099 = vsel %vm2098, %v1654, %v2097
        %vm2100 = vcmp.eq.f32.partialorder %v1654, 0.0
        %v2101 = vand.u32 %v1654, 2147483648
        %v2102 = vsel %vm2100, %v2101, %v2099
        %v2103 = vsub.f32 0.0, %v1661
        %v2104 = vsub.f32 0.0, %v1668
        %v2105 = vsub.f32 0.0, %v1675
        %v2106 = vsub.f32 0.0, %v1682
        %v2107 = vsub.f32 0.0, %v1689
        %v2108 = vsub.f32 0.0, %v1696
        %v2109 = vsub.f32 0.0, %v1703
        %v2110 = vsub.f32 0.0, %v1710
        %v2111 = vsub.f32 0.0, %v1717
        %v2112 = vsub.f32 0.0, %v1724
        %v2113 = vsub.f32 0.0, %v1731
        %v2114 = vsub.f32 0.0, %v1738
        %v2115 = vsub.f32 0.0, %v1745
        %v2116 = vsub.f32 0.0, %v1752
        %v2117 = vsub.f32 0.0, %v1759
        %v2118 = vsub.f32 0.0, %v1766
        %v2119 = vsub.f32 0.0, %v1773
        %v2120 = vsub.f32 0.0, %v1780
        %v2121 = vsub.f32 0.0, %v1787
        %v2122 = vsub.f32 0.0, %v1794
        %v2123 = vsub.f32 0.0, %v1801
        %v2124 = vsub.f32 0.0, %v1808
        %v2125 = vsub.f32 0.0, %v1815
        %v2126 = vsub.f32 0.0, %v1822
        %v2127 = vsub.f32 0.0, %v1829
        %v2128 = vsub.f32 0.0, %v1836
        %v2129 = vsub.f32 0.0, %v1843
        %v2130 = vsub.f32 0.0, %v1850
        %v2131 = vsub.f32 0.0, %v1857
        %v2132 = vsub.f32 0.0, %v1864
        %v2133 = vsub.f32 0.0, %v1871
        %v2134 = vsub.f32 0.0, %v1878
        %v2135 = vsub.f32 0.0, %v1885
        %v2136 = vsub.f32 0.0, %v1892
        %v2137 = vsub.f32 0.0, %v1899
        %v2138 = vsub.f32 0.0, %v1906
        %v2139 = vsub.f32 0.0, %v1913
        %v2140 = vsub.f32 0.0, %v1920
        %v2141 = vsub.f32 0.0, %v1927
        %v2142 = vsub.f32 0.0, %v1934
        %v2143 = vsub.f32 0.0, %v1941
        %v2144 = vsub.f32 0.0, %v1948
        %v2145 = vsub.f32 0.0, %v1955
        %v2146 = vsub.f32 0.0, %v1962
        %v2147 = vsub.f32 0.0, %v1969
        %v2148 = vsub.f32 0.0, %v1976
        %v2149 = vsub.f32 0.0, %v1983
        %v2150 = vsub.f32 0.0, %v1990
        %v2151 = vsub.f32 0.0, %v1997
        %v2152 = vsub.f32 0.0, %v2004
        %v2153 = vsub.f32 0.0, %v2011
        %v2154 = vsub.f32 0.0, %v2018
        %v2155 = vsub.f32 0.0, %v2025
        %v2156 = vsub.f32 0.0, %v2032
        %v2157 = vsub.f32 0.0, %v2039
        %v2158 = vsub.f32 0.0, %v2046
        %v2159 = vsub.f32 0.0, %v2053
        %v2160 = vsub.f32 0.0, %v2060
        %v2161 = vsub.f32 0.0, %v2067
        %v2162 = vsub.f32 0.0, %v2074
        %v2163 = vsub.f32 0.0, %v2081
        %v2164 = vsub.f32 0.0, %v2088
        %v2165 = vsub.f32 0.0, %v2095
        %v2166 = vsub.f32 0.0, %v2102
        %v2167 = vmul.f32 %v2103, 0.25
        %v2168 = vmul.f32 %v2104, 0.25
        %v2169 = vmul.f32 %v2105, 0.25
        %v2170 = vmul.f32 %v2106, 0.25
        %v2171 = vmul.f32 %v2107, 0.25
        %v2172 = vmul.f32 %v2108, 0.25
        %v2173 = vmul.f32 %v2109, 0.25
        %v2174 = vmul.f32 %v2110, 0.25
        %v2175 = vmul.f32 %v2111, 0.25
        %v2176 = vmul.f32 %v2112, 0.25
        %v2177 = vmul.f32 %v2113, 0.25
        %v2178 = vmul.f32 %v2114, 0.25
        %v2179 = vmul.f32 %v2115, 0.25
        %v2180 = vmul.f32 %v2116, 0.25
        %v2181 = vmul.f32 %v2117, 0.25
        %v2182 = vmul.f32 %v2118, 0.25
        %v2183 = vmul.f32 %v2119, 0.25
        %v2184 = vmul.f32 %v2120, 0.25
        %v2185 = vmul.f32 %v2121, 0.25
        %v2186 = vmul.f32 %v2122, 0.25
        %v2187 = vmul.f32 %v2123, 0.25
        %v2188 = vmul.f32 %v2124, 0.25
        %v2189 = vmul.f32 %v2125, 0.25
        %v2190 = vmul.f32 %v2126, 0.25
        %v2191 = vmul.f32 %v2127, 0.25
        %v2192 = vmul.f32 %v2128, 0.25
        %v2193 = vmul.f32 %v2129, 0.25
        %v2194 = vmul.f32 %v2130, 0.25
        %v2195 = vmul.f32 %v2131, 0.25
        %v2196 = vmul.f32 %v2132, 0.25
        %v2197 = vmul.f32 %v2133, 0.25
        %v2198 = vmul.f32 %v2134, 0.25
        %v2199 = vmul.f32 %v2135, 0.25
        %v2200 = vmul.f32 %v2136, 0.25
        %v2201 = vmul.f32 %v2137, 0.25
        %v2202 = vmul.f32 %v2138, 0.25
        %v2203 = vmul.f32 %v2139, 0.25
        %v2204 = vmul.f32 %v2140, 0.25
        %v2205 = vmul.f32 %v2141, 0.25
        %v2206 = vmul.f32 %v2142, 0.25
        %v2207 = vmul.f32 %v2143, 0.25
        %v2208 = vmul.f32 %v2144, 0.25
        %v2209 = vmul.f32 %v2145, 0.25
        %v2210 = vmul.f32 %v2146, 0.25
        %v2211 = vmul.f32 %v2147, 0.25
        %v2212 = vmul.f32 %v2148, 0.25
        %v2213 = vmul.f32 %v2149, 0.25
        %v2214 = vmul.f32 %v2150, 0.25
        %v2215 = vmul.f32 %v2151, 0.25
        %v2216 = vmul.f32 %v2152, 0.25
        %v2217 = vmul.f32 %v2153, 0.25
        %v2218 = vmul.f32 %v2154, 0.25
        %v2219 = vmul.f32 %v2155, 0.25
        %v2220 = vmul.f32 %v2156, 0.25
        %v2221 = vmul.f32 %v2157, 0.25
        %v2222 = vmul.f32 %v2158, 0.25
        %v2223 = vmul.f32 %v2159, 0.25
        %v2224 = vmul.f32 %v2160, 0.25
        %v2225 = vmul.f32 %v2161, 0.25
        %v2226 = vmul.f32 %v2162, 0.25
        %v2227 = vmul.f32 %v2163, 0.25
        %v2228 = vmul.f32 %v2164, 0.25
        %v2229 = vmul.f32 %v2165, 0.25
        %v2230 = vmul.f32 %v2166, 0.25
        %v2231 = vmul.f32 %v2167, 1.442695
        %v2232 = vpow.pop %v2231
        %v2233 = vmul.f32 %v2168, 1.442695
        %v2234 = vpow.pop %v2233
        %v2235 = vmul.f32 %v2169, 1.442695
        %v2236 = vpow.pop %v2235
        %v2237 = vmul.f32 %v2170, 1.442695
        %v2238 = vpow.pop %v2237
        %v2239 = vmul.f32 %v2171, 1.442695
        %v2240 = vpow.pop %v2239
        %v2241 = vmul.f32 %v2172, 1.442695
        %v2242 = vpow.pop %v2241
        %v2243 = vmul.f32 %v2173, 1.442695
        %v2244 = vpow.pop %v2243
        %v2245 = vmul.f32 %v2174, 1.442695
        %v2246 = vpow.pop %v2245
        %v2247 = vmul.f32 %v2175, 1.442695
        %v2248 = vpow.pop %v2247
        %v2249 = vmul.f32 %v2176, 1.442695
        %v2250 = vpow.pop %v2249
        %v2251 = vmul.f32 %v2177, 1.442695
        %v2252 = vpow.pop %v2251
        %v2253 = vmul.f32 %v2178, 1.442695
        %v2254 = vpow.pop %v2253
        %v2255 = vmul.f32 %v2179, 1.442695
        %v2256 = vpow.pop %v2255
        %v2257 = vmul.f32 %v2180, 1.442695
        %v2258 = vpow.pop %v2257
        %v2259 = vmul.f32 %v2181, 1.442695
        %v2260 = vpow.pop %v2259
        %v2261 = vmul.f32 %v2182, 1.442695
        %v2262 = vpow.pop %v2261
        %v2263 = vmul.f32 %v2183, 1.442695
        %v2264 = vpow.pop %v2263
        %v2265 = vmul.f32 %v2184, 1.442695
        %v2266 = vpow.pop %v2265
        %v2267 = vmul.f32 %v2185, 1.442695
        %v2268 = vpow.pop %v2267
        %v2269 = vmul.f32 %v2186, 1.442695
        %v2270 = vpow.pop %v2269
        %v2271 = vmul.f32 %v2187, 1.442695
        %v2272 = vpow.pop %v2271
        %v2273 = vmul.f32 %v2188, 1.442695
        %v2274 = vpow.pop %v2273
        %v2275 = vmul.f32 %v2189, 1.442695
        %v2276 = vpow.pop %v2275
        %v2277 = vmul.f32 %v2190, 1.442695
        %v2278 = vpow.pop %v2277
        %v2279 = vmul.f32 %v2191, 1.442695
        %v2280 = vpow.pop %v2279
        %v2281 = vmul.f32 %v2192, 1.442695
        %v2282 = vpow.pop %v2281
        %v2283 = vmul.f32 %v2193, 1.442695
        %v2284 = vpow.pop %v2283
        %v2285 = vmul.f32 %v2194, 1.442695
        %v2286 = vpow.pop %v2285
        %v2287 = vmul.f32 %v2195, 1.442695
        %v2288 = vpow.pop %v2287
        %v2289 = vmul.f32 %v2196, 1.442695
        %v2290 = vpow.pop %v2289
        %v2291 = vmul.f32 %v2197, 1.442695
        %v2292 = vpow.pop %v2291
        %v2293 = vmul.f32 %v2198, 1.442695
        %v2294 = vpow.pop %v2293
        %v2295 = vmul.f32 %v2199, 1.442695
        %v2296 = vpow.pop %v2295
        %v2297 = vmul.f32 %v2200, 1.442695
        %v2298 = vpow.pop %v2297
        %v2299 = vmul.f32 %v2201, 1.442695
        %v2300 = vpow.pop %v2299
        %v2301 = vmul.f32 %v2202, 1.442695
        %v2302 = vpow.pop %v2301
        %v2303 = vmul.f32 %v2203, 1.442695
        %v2304 = vpow.pop %v2303
        %v2305 = vmul.f32 %v2204, 1.442695
        %v2306 = vpow.pop %v2305
        %v2307 = vmul.f32 %v2205, 1.442695
        %v2308 = vpow.pop %v2307
        %v2309 = vmul.f32 %v2206, 1.442695
        %v2310 = vpow.pop %v2309
        %v2311 = vmul.f32 %v2207, 1.442695
        %v2312 = vpow.pop %v2311
        %v2313 = vmul.f32 %v2208, 1.442695
        %v2314 = vpow.pop %v2313
        %v2315 = vmul.f32 %v2209, 1.442695
        %v2316 = vpow.pop %v2315
        %v2317 = vmul.f32 %v2210, 1.442695
        %v2318 = vpow.pop %v2317
        %v2319 = vmul.f32 %v2211, 1.442695
        %v2320 = vpow.pop %v2319
        %v2321 = vmul.f32 %v2212, 1.442695
        %v2322 = vpow.pop %v2321
        %v2323 = vmul.f32 %v2213, 1.442695
        %v2324 = vpow.pop %v2323
        %v2325 = vmul.f32 %v2214, 1.442695
        %v2326 = vpow.pop %v2325
        %v2327 = vmul.f32 %v2215, 1.442695
        %v2328 = vpow.pop %v2327
        %v2329 = vmul.f32 %v2216, 1.442695
        %v2330 = vpow.pop %v2329
        %v2331 = vmul.f32 %v2217, 1.442695
        %v2332 = vpow.pop %v2331
        %v2333 = vmul.f32 %v2218, 1.442695
        %v2334 = vpow.pop %v2333
        %v2335 = vmul.f32 %v2219, 1.442695
        %v2336 = vpow.pop %v2335
        %v2337 = vmul.f32 %v2220, 1.442695
        %v2338 = vpow.pop %v2337
        %v2339 = vmul.f32 %v2221, 1.442695
        %v2340 = vpow.pop %v2339
        %v2341 = vmul.f32 %v2222, 1.442695
        %v2342 = vpow.pop %v2341
        %v2343 = vmul.f32 %v2223, 1.442695
        %v2344 = vpow.pop %v2343
        %v2345 = vmul.f32 %v2224, 1.442695
        %v2346 = vpow.pop %v2345
        %v2347 = vmul.f32 %v2225, 1.442695
        %v2348 = vpow.pop %v2347
        %v2349 = vmul.f32 %v2226, 1.442695
        %v2350 = vpow.pop %v2349
        %v2351 = vmul.f32 %v2227, 1.442695
        %v2352 = vpow.pop %v2351
        %v2353 = vmul.f32 %v2228, 1.442695
        %v2354 = vpow.pop %v2353
        %v2355 = vmul.f32 %v2229, 1.442695
        %v2356 = vpow.pop %v2355
        %v2357 = vmul.f32 %v2230, 1.442695
        %v2358 = vpow.pop %v2357
        %v2359 = vld [vmem:[%s385] sm:$0xff]
        %v2360 = vld [vmem:[%s376] sm:$0xff]
        %p2361 = scmp.eq.s32.totalorder %s510, %s511
        // Predicated region
        $region57: #{tpu_custom_call.1} parent=43 // pred_check
          %p2362 = pneg %p2361
        $region58: #{tpu_custom_call.1} parent=43 // pred_check_branch
          %2364 = sbr.rel (%p2362) target = $region60
        $region59: #{tpu_custom_call.1} parent=43 // pred_region
          %v2365 = vld [vmem:[#allocation3] sm:$0xff]
          %v2366 = vld [vmem:[#allocation3 + $0x8] sm:$0xff]
          %v2367 = vld [vmem:[#allocation3 + $0x10] sm:$0xff]
          %v2368 = vld [vmem:[#allocation3 + $0x18] sm:$0xff]
          %v2369 = vld [vmem:[#allocation3 + $0x20] sm:$0xff]
          %v2370 = vld [vmem:[#allocation3 + $0x28] sm:$0xff]
          %v2371 = vld [vmem:[#allocation3 + $0x30] sm:$0xff]
          %v2372 = vld [vmem:[#allocation3 + $0x38] sm:$0xff]
          %v2373 = vld [vmem:[#allocation3 + $0x40] sm:$0xff]
          %v2374 = vld [vmem:[#allocation3 + $0x48] sm:$0xff]
          %v2375 = vld [vmem:[#allocation3 + $0x50] sm:$0xff]
          %v2376 = vld [vmem:[#allocation3 + $0x58] sm:$0xff]
          %v2377 = vld [vmem:[#allocation3 + $0x60] sm:$0xff]
          %v2378 = vld [vmem:[#allocation3 + $0x68] sm:$0xff]
          %v2379 = vld [vmem:[#allocation3 + $0x70] sm:$0xff]
          %v2380 = vld [vmem:[#allocation3 + $0x78] sm:$0xff]
          %v2381 = vld [vmem:[#allocation3 + $0x80] sm:$0xff]
          %v2382 = vld [vmem:[#allocation3 + $0x88] sm:$0xff]
          %v2383 = vld [vmem:[#allocation3 + $0x90] sm:$0xff]
          %v2384 = vld [vmem:[#allocation3 + $0x98] sm:$0xff]
          %v2385 = vld [vmem:[#allocation3 + $0xa0] sm:$0xff]
          %v2386 = vld [vmem:[#allocation3 + $0xa8] sm:$0xff]
          %v2387 = vld [vmem:[#allocation3 + $0xb0] sm:$0xff]
          %v2388 = vld [vmem:[#allocation3 + $0xb8] sm:$0xff]
          %v2389 = vld [vmem:[#allocation3 + $0xc0] sm:$0xff]
          %v2390 = vld [vmem:[#allocation3 + $0xc8] sm:$0xff]
          %v2391 = vld [vmem:[#allocation3 + $0xd0] sm:$0xff]
          %v2392 = vld [vmem:[#allocation3 + $0xd8] sm:$0xff]
          %v2393 = vld [vmem:[#allocation3 + $0xe0] sm:$0xff]
          %v2394 = vld [vmem:[#allocation3 + $0xe8] sm:$0xff]
          %v2395 = vld [vmem:[#allocation3 + $0xf0] sm:$0xff]
          %v2396 = vld [vmem:[#allocation3 + $0xf8] sm:$0xff]
          %v2397 = vld [vmem:[#allocation3 + $0x100] sm:$0xff]
          %v2398 = vld [vmem:[#allocation3 + $0x108] sm:$0xff]
          %v2399 = vld [vmem:[#allocation3 + $0x110] sm:$0xff]
          %v2400 = vld [vmem:[#allocation3 + $0x118] sm:$0xff]
          %v2401 = vld [vmem:[#allocation3 + $0x120] sm:$0xff]
          %v2402 = vld [vmem:[#allocation3 + $0x128] sm:$0xff]
          %v2403 = vld [vmem:[#allocation3 + $0x130] sm:$0xff]
          %v2404 = vld [vmem:[#allocation3 + $0x138] sm:$0xff]
          %v2405 = vld [vmem:[#allocation3 + $0x140] sm:$0xff]
          %v2406 = vld [vmem:[#allocation3 + $0x148] sm:$0xff]
          %v2407 = vld [vmem:[#allocation3 + $0x150] sm:$0xff]
          %v2408 = vld [vmem:[#allocation3 + $0x158] sm:$0xff]
          %v2409 = vld [vmem:[#allocation3 + $0x160] sm:$0xff]
          %v2410 = vld [vmem:[#allocation3 + $0x168] sm:$0xff]
          %v2411 = vld [vmem:[#allocation3 + $0x170] sm:$0xff]
          %v2412 = vld [vmem:[#allocation3 + $0x178] sm:$0xff]
          %v2413 = vld [vmem:[#allocation3 + $0x180] sm:$0xff]
          %v2414 = vld [vmem:[#allocation3 + $0x188] sm:$0xff]
          %v2415 = vld [vmem:[#allocation3 + $0x190] sm:$0xff]
          %v2416 = vld [vmem:[#allocation3 + $0x198] sm:$0xff]
          %v2417 = vld [vmem:[#allocation3 + $0x1a0] sm:$0xff]
          %v2418 = vld [vmem:[#allocation3 + $0x1a8] sm:$0xff]
          %v2419 = vld [vmem:[#allocation3 + $0x1b0] sm:$0xff]
          %v2420 = vld [vmem:[#allocation3 + $0x1b8] sm:$0xff]
          %v2421 = vld [vmem:[#allocation3 + $0x1c0] sm:$0xff]
          %v2422 = vld [vmem:[#allocation3 + $0x1c8] sm:$0xff]
          %v2423 = vld [vmem:[#allocation3 + $0x1d0] sm:$0xff]
          %v2424 = vld [vmem:[#allocation3 + $0x1d8] sm:$0xff]
          %v2425 = vld [vmem:[#allocation3 + $0x1e0] sm:$0xff]
          %v2426 = vld [vmem:[#allocation3 + $0x1e8] sm:$0xff]
          %v2427 = vld [vmem:[#allocation3 + $0x1f0] sm:$0xff]
          %v2428 = vld [vmem:[#allocation3 + $0x1f8] sm:$0xff]
          %v2429 = vmul.f32 %v2232, %v2365
          %v2430 = vmul.f32 %v2234, %v2366
          %v2431 = vmul.f32 %v2236, %v2367
          %v2432 = vmul.f32 %v2238, %v2368
          %v2433 = vmul.f32 %v2240, %v2369
          %v2434 = vmul.f32 %v2242, %v2370
          %v2435 = vmul.f32 %v2244, %v2371
          %v2436 = vmul.f32 %v2246, %v2372
          %v2437 = vmul.f32 %v2248, %v2373
          %v2438 = vmul.f32 %v2250, %v2374
          %v2439 = vmul.f32 %v2252, %v2375
          %v2440 = vmul.f32 %v2254, %v2376
          %v2441 = vmul.f32 %v2256, %v2377
          %v2442 = vmul.f32 %v2258, %v2378
          %v2443 = vmul.f32 %v2260, %v2379
          %v2444 = vmul.f32 %v2262, %v2380
          %v2445 = vmul.f32 %v2264, %v2381
          %v2446 = vmul.f32 %v2266, %v2382
          %v2447 = vmul.f32 %v2268, %v2383
          %v2448 = vmul.f32 %v2270, %v2384
          %v2449 = vmul.f32 %v2272, %v2385
          %v2450 = vmul.f32 %v2274, %v2386
          %v2451 = vmul.f32 %v2276, %v2387
          %v2452 = vmul.f32 %v2278, %v2388
          %v2453 = vmul.f32 %v2280, %v2389
          %v2454 = vmul.f32 %v2282, %v2390
          %v2455 = vmul.f32 %v2284, %v2391
          %v2456 = vmul.f32 %v2286, %v2392
          %v2457 = vmul.f32 %v2288, %v2393
          %v2458 = vmul.f32 %v2290, %v2394
          %v2459 = vmul.f32 %v2292, %v2395
          %v2460 = vmul.f32 %v2294, %v2396
          %v2461 = vmul.f32 %v2296, %v2397
          %v2462 = vmul.f32 %v2298, %v2398
          %v2463 = vmul.f32 %v2300, %v2399
          %v2464 = vmul.f32 %v2302, %v2400
          %v2465 = vmul.f32 %v2304, %v2401
          %v2466 = vmul.f32 %v2306, %v2402
          %v2467 = vmul.f32 %v2308, %v2403
          %v2468 = vmul.f32 %v2310, %v2404
          %v2469 = vmul.f32 %v2312, %v2405
          %v2470 = vmul.f32 %v2314, %v2406
          %v2471 = vmul.f32 %v2316, %v2407
          %v2472 = vmul.f32 %v2318, %v2408
          %v2473 = vmul.f32 %v2320, %v2409
          %v2474 = vmul.f32 %v2322, %v2410
          %v2475 = vmul.f32 %v2324, %v2411
          %v2476 = vmul.f32 %v2326, %v2412
          %v2477 = vmul.f32 %v2328, %v2413
          %v2478 = vmul.f32 %v2330, %v2414
          %v2479 = vmul.f32 %v2332, %v2415
          %v2480 = vmul.f32 %v2334, %v2416
          %v2481 = vmul.f32 %v2336, %v2417
          %v2482 = vmul.f32 %v2338, %v2418
          %v2483 = vmul.f32 %v2340, %v2419
          %v2484 = vmul.f32 %v2342, %v2420
          %v2485 = vmul.f32 %v2344, %v2421
          %v2486 = vmul.f32 %v2346, %v2422
          %v2487 = vmul.f32 %v2348, %v2423
          %v2488 = vmul.f32 %v2350, %v2424
          %v2489 = vmul.f32 %v2352, %v2425
          %v2490 = vmul.f32 %v2354, %v2426
          %v2491 = vmul.f32 %v2356, %v2427
          %v2492 = vmul.f32 %v2358, %v2428
          %v2493 = vpack.c.bf16 %v2431, %v2429
          %v2494 = vpack.c.bf16 %v2432, %v2430
          %v2495 = vpack.c.bf16 %v2435, %v2433
          %v2496 = vpack.c.bf16 %v2436, %v2434
          %v2497 = vpack.c.bf16 %v2439, %v2437
          %v2498 = vpack.c.bf16 %v2440, %v2438
          %v2499 = vpack.c.bf16 %v2443, %v2441
          %v2500 = vpack.c.bf16 %v2444, %v2442
          %v2501 = vpack.c.bf16 %v2447, %v2445
          %v2502 = vpack.c.bf16 %v2448, %v2446
          %v2503 = vpack.c.bf16 %v2451, %v2449
          %v2504 = vpack.c.bf16 %v2452, %v2450
          %v2505 = vpack.c.bf16 %v2455, %v2453
          %v2506 = vpack.c.bf16 %v2456, %v2454
          %v2507 = vpack.c.bf16 %v2459, %v2457
          %v2508 = vpack.c.bf16 %v2460, %v2458
          %v2509 = vpack.c.bf16 %v2463, %v2461
          %v2510 = vpack.c.bf16 %v2464, %v2462
          %v2511 = vpack.c.bf16 %v2467, %v2465
          %v2512 = vpack.c.bf16 %v2468, %v2466
          %v2513 = vpack.c.bf16 %v2471, %v2469
          %v2514 = vpack.c.bf16 %v2472, %v2470
          %v2515 = vpack.c.bf16 %v2475, %v2473
          %v2516 = vpack.c.bf16 %v2476, %v2474
          %v2517 = vpack.c.bf16 %v2479, %v2477
          %v2518 = vpack.c.bf16 %v2480, %v2478
          %v2519 = vpack.c.bf16 %v2483, %v2481
          %v2520 = vpack.c.bf16 %v2484, %v2482
          %v2521 = vpack.c.bf16 %v2487, %v2485
          %v2522 = vpack.c.bf16 %v2488, %v2486
          %v2523 = vpack.c.bf16 %v2491, %v2489
          %v2524 = vpack.c.bf16 %v2492, %v2490
          %s2525 = smul.u32 %s510, 2
          %s2526 = smul.addr %s2525, 8
          %s2527 = scalar_lea.vmem [#allocation2], %s2526
          %v2528 = vld [vmem:[%s2527] sm:$0xff]
          %v2529 = vld [vmem:[%s2527 + $0x8] sm:$0xff]
          %v2531 = vunpack.c.l.b16 %v2359
          %v2532 = vunpack.c.h.b16 %v2359
          %v2533 = vpack.c.b16 %v2531, %v2531
          %v2534 = vpack.c.b16 %v2532, %v2532
          %2537 = vmatprep.subr.bf16.mxu0 %v2508
          %2538 = vmatpush1.bf16.xpose.msra.mxu0 %v2507
          %2539 = vmatprep.subr.bf16.mxu0 %v2506
          %2540 = vmatpush1.bf16.xpose.msra.mxu0 %v2505
          %2541 = vmatprep.subr.bf16.mxu0 %v2504
          %2542 = vmatpush1.bf16.xpose.msra.mxu0 %v2503
          %2543 = vmatprep.subr.bf16.mxu0 %v2502
          %2544 = vmatpush1.bf16.xpose.msra.mxu0 %v2501
          %2545 = vmatprep.subr.bf16.mxu0 %v2500
          %2546 = vmatpush1.bf16.xpose.msra.mxu0 %v2499
          %2547 = vmatprep.subr.bf16.mxu0 %v2498
          %2548 = vmatpush1.bf16.xpose.msra.mxu0 %v2497
          %2549 = vmatprep.subr.bf16.mxu0 %v2496
          %2550 = vmatpush1.bf16.xpose.msra.mxu0 %v2495
          %2551 = vmatprep.subr.bf16.mxu0 %v2494
          %2552 = vmatpush1.bf16.xpose.msra.mxu0 %v2493
          %2553 = vmatprep.subr.bf16.mxu0 %v2524
          %2554 = vmatpush2.bf16.xpose.msra.mxu0 %v2523
          %2555 = vmatprep.subr.bf16.mxu0 %v2522
          %2556 = vmatpush2.bf16.xpose.msra.mxu0 %v2521
          %2557 = vmatprep.subr.bf16.mxu0 %v2520
          %2558 = vmatpush2.bf16.xpose.msra.mxu0 %v2519
          %2559 = vmatprep.subr.bf16.mxu0 %v2518
          %2560 = vmatpush2.bf16.xpose.msra.mxu0 %v2517
          %2561 = vmatprep.subr.bf16.mxu0 %v2516
          %2562 = vmatpush2.bf16.xpose.msra.mxu0 %v2515
          %2563 = vmatprep.subr.bf16.mxu0 %v2514
          %2564 = vmatpush2.bf16.xpose.msra.mxu0 %v2513
          %2565 = vmatprep.subr.bf16.mxu0 %v2512
          %2566 = vmatpush2.bf16.xpose.msra.mxu0 %v2511
          %2567 = vmatprep.subr.bf16.mxu0 %v2510
          %2568 = vmatpush2.bf16.xpose.msra.mxu0 %v2509
          %2569 = vmatprep.mubr.bf16.mxu0 %v2534
          %2570 = vmatmul.mubr.bf16.gmra.mxu0 %v2533
          %v2571 = vpop.f32.mrf.mxu0
          %v2572 = vadd.f32 0.0, %v2571
          %v2573 = vpop.f32.mrf.mxu0
          %v2574 = vadd.f32 0.0, %v2573
          %v2575 = vpop.f32.mrf.mxu0
          %v2576 = vpop.f32.mrf.mxu0
          %2577 = vdwg.mxu0
          %v2578 = vadd.f32 %v2528, %v2572
          %v2579 = vadd.f32 %v2529, %v2574
          %2580 = vst [vmem:[%s2527] sm:$0xff] %v2578
          %2581 = vst [vmem:[%s2527 + $0x8] sm:$0xff] %v2579
        $region60: #{tpu_custom_call.1} parent=43 // pred_fallthru
          _
        %p2582 = scmp.ne.s32.totalorder %s510, %s511
        // Predicated region
        $region61: #{tpu_custom_call.1} parent=43 // pred_check
          %p2583 = pneg %p2582
        $region62: #{tpu_custom_call.1} parent=43 // pred_check_branch
          %2585 = sbr.rel (%p2583) target = $region64
        $region63: #{tpu_custom_call.1} parent=43 // pred_region
          %v2586 = vpack.c.bf16 %v2236, %v2232
          %v2587 = vpack.c.bf16 %v2238, %v2234
          %v2588 = vpack.c.bf16 %v2244, %v2240
          %v2589 = vpack.c.bf16 %v2246, %v2242
          %v2590 = vpack.c.bf16 %v2252, %v2248
          %v2591 = vpack.c.bf16 %v2254, %v2250
          %v2592 = vpack.c.bf16 %v2260, %v2256
          %v2593 = vpack.c.bf16 %v2262, %v2258
          %v2594 = vpack.c.bf16 %v2268, %v2264
          %v2595 = vpack.c.bf16 %v2270, %v2266
          %v2596 = vpack.c.bf16 %v2276, %v2272
          %v2597 = vpack.c.bf16 %v2278, %v2274
          %v2598 = vpack.c.bf16 %v2284, %v2280
          %v2599 = vpack.c.bf16 %v2286, %v2282
          %v2600 = vpack.c.bf16 %v2292, %v2288
          %v2601 = vpack.c.bf16 %v2294, %v2290
          %v2602 = vpack.c.bf16 %v2300, %v2296
          %v2603 = vpack.c.bf16 %v2302, %v2298
          %v2604 = vpack.c.bf16 %v2308, %v2304
          %v2605 = vpack.c.bf16 %v2310, %v2306
          %v2606 = vpack.c.bf16 %v2316, %v2312
          %v2607 = vpack.c.bf16 %v2318, %v2314
          %v2608 = vpack.c.bf16 %v2324, %v2320
          %v2609 = vpack.c.bf16 %v2326, %v2322
          %v2610 = vpack.c.bf16 %v2332, %v2328
          %v2611 = vpack.c.bf16 %v2334, %v2330
          %v2612 = vpack.c.bf16 %v2340, %v2336
          %v2613 = vpack.c.bf16 %v2342, %v2338
          %v2614 = vpack.c.bf16 %v2348, %v2344
          %v2615 = vpack.c.bf16 %v2350, %v2346
          %v2616 = vpack.c.bf16 %v2356, %v2352
          %v2617 = vpack.c.bf16 %v2358, %v2354
          %s2618 = smul.u32 %s510, 2
          %s2619 = smul.addr %s2618, 8
          %s2620 = scalar_lea.vmem [#allocation2], %s2619
          %v2621 = vld [vmem:[%s2620] sm:$0xff]
          %v2622 = vld [vmem:[%s2620 + $0x8] sm:$0xff]
          %v2624 = vunpack.c.l.b16 %v2359
          %v2625 = vunpack.c.h.b16 %v2359
          %v2626 = vpack.c.b16 %v2624, %v2624
          %v2627 = vpack.c.b16 %v2625, %v2625
          %2630 = vmatprep.subr.bf16.mxu0 %v2601
          %2631 = vmatpush1.bf16.xpose.msra.mxu0 %v2600
          %2632 = vmatprep.subr.bf16.mxu0 %v2599
          %2633 = vmatpush1.bf16.xpose.msra.mxu0 %v2598
          %2634 = vmatprep.subr.bf16.mxu0 %v2597
          %2635 = vmatpush1.bf16.xpose.msra.mxu0 %v2596
          %2636 = vmatprep.subr.bf16.mxu0 %v2595
          %2637 = vmatpush1.bf16.xpose.msra.mxu0 %v2594
          %2638 = vmatprep.subr.bf16.mxu0 %v2593
          %2639 = vmatpush1.bf16.xpose.msra.mxu0 %v2592
          %2640 = vmatprep.subr.bf16.mxu0 %v2591
          %2641 = vmatpush1.bf16.xpose.msra.mxu0 %v2590
          %2642 = vmatprep.subr.bf16.mxu0 %v2589
          %2643 = vmatpush1.bf16.xpose.msra.mxu0 %v2588
          %2644 = vmatprep.subr.bf16.mxu0 %v2587
          %2645 = vmatpush1.bf16.xpose.msra.mxu0 %v2586
          %2646 = vmatprep.subr.bf16.mxu0 %v2617
          %2647 = vmatpush2.bf16.xpose.msra.mxu0 %v2616
          %2648 = vmatprep.subr.bf16.mxu0 %v2615
          %2649 = vmatpush2.bf16.xpose.msra.mxu0 %v2614
          %2650 = vmatprep.subr.bf16.mxu0 %v2613
          %2651 = vmatpush2.bf16.xpose.msra.mxu0 %v2612
          %2652 = vmatprep.subr.bf16.mxu0 %v2611
          %2653 = vmatpush2.bf16.xpose.msra.mxu0 %v2610
          %2654 = vmatprep.subr.bf16.mxu0 %v2609
          %2655 = vmatpush2.bf16.xpose.msra.mxu0 %v2608
          %2656 = vmatprep.subr.bf16.mxu0 %v2607
          %2657 = vmatpush2.bf16.xpose.msra.mxu0 %v2606
          %2658 = vmatprep.subr.bf16.mxu0 %v2605
          %2659 = vmatpush2.bf16.xpose.msra.mxu0 %v2604
          %2660 = vmatprep.subr.bf16.mxu0 %v2603
          %2661 = vmatpush2.bf16.xpose.msra.mxu0 %v2602
          %2662 = vmatprep.mubr.bf16.mxu0 %v2627
          %2663 = vmatmul.mubr.bf16.gmra.mxu0 %v2626
          %v2664 = vpop.f32.mrf.mxu0
          %v2665 = vadd.f32 0.0, %v2664
          %v2666 = vpop.f32.mrf.mxu0
          %v2667 = vadd.f32 0.0, %v2666
          %v2668 = vpop.f32.mrf.mxu0
          %v2669 = vpop.f32.mrf.mxu0
          %2670 = vdwg.mxu0
          %v2671 = vadd.f32 %v2621, %v2665
          %v2672 = vadd.f32 %v2622, %v2667
          %2673 = vst [vmem:[%s2620] sm:$0xff] %v2671
          %2674 = vst [vmem:[%s2620 + $0x8] sm:$0xff] %v2672
          %s2675 = smul.u32 %s511, 2
          %s2676 = smul.addr %s2675, 8
          %s2677 = scalar_lea.vmem [#allocation2], %s2676
          %v2678 = vld [vmem:[%s2677] sm:$0xff]
          %v2679 = vld [vmem:[%s2677 + $0x8] sm:$0xff]
          %v2681 = vunpack.c.l.b16 %v2360
          %v2682 = vunpack.c.h.b16 %v2360
          %v2683 = vpack.c.b16 %v2681, %v2681
          %v2684 = vpack.c.b16 %v2682, %v2682
          %2687 = vmatprep.subr.bf16.mxu0 %v2601
          %2688 = vmatpush1.bf16.msra.mxu0 %v2600
          %2689 = vmatprep.subr.bf16.mxu0 %v2599
          %2690 = vmatpush1.bf16.msra.mxu0 %v2598
          %2691 = vmatprep.subr.bf16.mxu0 %v2597
          %2692 = vmatpush1.bf16.msra.mxu0 %v2596
          %2693 = vmatprep.subr.bf16.mxu0 %v2595
          %2694 = vmatpush1.bf16.msra.mxu0 %v2594
          %2695 = vmatprep.subr.bf16.mxu0 %v2593
          %2696 = vmatpush1.bf16.msra.mxu0 %v2592
          %2697 = vmatprep.subr.bf16.mxu0 %v2591
          %2698 = vmatpush1.bf16.msra.mxu0 %v2590
          %2699 = vmatprep.subr.bf16.mxu0 %v2589
          %2700 = vmatpush1.bf16.msra.mxu0 %v2588
          %2701 = vmatprep.subr.bf16.mxu0 %v2587
          %2702 = vmatpush1.bf16.msra.mxu0 %v2586
          %2703 = vmatprep.subr.bf16.mxu0 %v2617
          %2704 = vmatpush2.bf16.msra.mxu0 %v2616
          %2705 = vmatprep.subr.bf16.mxu0 %v2615
          %2706 = vmatpush2.bf16.msra.mxu0 %v2614
          %2707 = vmatprep.subr.bf16.mxu0 %v2613
          %2708 = vmatpush2.bf16.msra.mxu0 %v2612
          %2709 = vmatprep.subr.bf16.mxu0 %v2611
          %2710 = vmatpush2.bf16.msra.mxu0 %v2610
          %2711 = vmatprep.subr.bf16.mxu0 %v2609
          %2712 = vmatpush2.bf16.msra.mxu0 %v2608
          %2713 = vmatprep.subr.bf16.mxu0 %v2607
          %2714 = vmatpush2.bf16.msra.mxu0 %v2606
          %2715 = vmatprep.subr.bf16.mxu0 %v2605
          %2716 = vmatpush2.bf16.msra.mxu0 %v2604
          %2717 = vmatprep.subr.bf16.mxu0 %v2603
          %2718 = vmatpush2.bf16.msra.mxu0 %v2602
          %2719 = vmatprep.mubr.bf16.mxu0 %v2684
          %2720 = vmatmul.mubr.bf16.gmra.mxu0 %v2683
          %v2721 = vpop.f32.mrf.mxu0
          %v2722 = vadd.f32 0.0, %v2721
          %v2723 = vpop.f32.mrf.mxu0
          %v2724 = vadd.f32 0.0, %v2723
          %v2725 = vpop.f32.mrf.mxu0
          %v2726 = vpop.f32.mrf.mxu0
          %2727 = vdwg.mxu0
          %v2728 = vadd.f32 %v2678, %v2722
          %v2729 = vadd.f32 %v2679, %v2724
          %2730 = vst [vmem:[%s2677] sm:$0xff] %v2728
          %2731 = vst [vmem:[%s2677 + $0x8] sm:$0xff] %v2729
        $region64: #{tpu_custom_call.1} parent=43 // pred_fallthru
          _
        // Predicated region
        $region65: #{tpu_custom_call.1} parent=43 // pred_check
          %p2732 = pneg %p512
        $region66: #{tpu_custom_call.1} parent=43 // pred_check_branch
          %2734 = sbr.rel (%p2732) target = $region68
        $region67: #{tpu_custom_call.1} parent=43 // pred_region
          %v2735 = vld [vmem:[#allocation2] sm:$0xff]
          %v2736 = vld [vmem:[#allocation2 + $0x8] sm:$0xff]
          %v2737 = vlaneseq
          %v2738 = vshrl.u32 %v2737, 7
          %v2739 = vsub.s32 3, %v2738
          %v2740 = vrot.slane %v2735, %v2739
          %v2741 = vlaneseq
          %v2742 = vshrl.u32 %v2741, 7
          %v2743 = vsub.s32 3, %v2742
          %v2744 = vrot.slane %v2736, %v2743
          %v2745 = vrcp.pop %v2740
          %v2746 = vmul.f32 %v2735, %v2745
          %v2747 = vrcp.pop %v2744
          %v2748 = vmul.f32 %v2736, %v2747
          %2749 = vst [vmem:[%s457] sm:$0xff] %v2746
          %2750 = vst [vmem:[%s457 + $0x8] sm:$0xff] %v2748
        $region68: #{tpu_custom_call.1} parent=43 // pred_fallthru
          _
        %s2751 = sand.u32 %s230, 1
        %s2752 = scalar_lea.sflag [#allocation9], %s2751
        %s2753 = sand.u32 %s230, 1
        %s2754 = smul.addr %s2753, 16
        %s2755 = scalar_lea.vmem [#allocation12], %s2754
        // Predicated region
        $region69: #{tpu_custom_call.1} parent=43 // pred_check
          %p2756 = pneg %p240
        $region70: #{tpu_custom_call.1} parent=43 // pred_check_branch
          %2758 = sbr.rel (%p2756) target = $region72
        $region71: #{tpu_custom_call.1} parent=43 // pred_region
          %s2760 = ssub.s32 256, 256
          %2761 = vsyncadd %s2752, %s2760
          %s2762 = smul.addr %s34, 2
          %s2763 = smul.addr %s2762, 128
          %s2764 = scalar_lea.hbm %s8, %s2763
          %s2766 = sshll.u32 %s2755, 4
          %s2767 = int_to_ptr.vmem [resolvable:$true] %s2766
          %2769 = dma.vmem_to_hbm [thread:$0]  %s2767, 256, %s2764, %s2752
        $region72: #{tpu_custom_call.1} parent=43 // pred_fallthru
          _
      $region44: #{tpu_custom_call.1} parent=5 // pred_fallthru
        _
      %p2770 = scmp.le.s32.totalorder 2, %s25
      // Predicated region
      $region73: #{tpu_custom_call.1} parent=5 // pred_check
        %p2771 = pneg %p2770
      $region74: #{tpu_custom_call.1} parent=5 // pred_check_branch
        %2773 = sbr.rel (%p2771) target = $region76
      $region75: #{tpu_custom_call.1} parent=5 // pred_region
        %s2774 = ssub.s32 %s25, 2
        // Predicated region
        $region77: #{tpu_custom_call.1} parent=75 // pred_check
          %p2775 = pneg %p246
        $region78: #{tpu_custom_call.1} parent=75 // pred_check_branch
          %2777 = sbr.rel (%p2775) target = $region80
        $region79: #{tpu_custom_call.1} parent=75 // pred_region
          %s2778 = sand.u32 %s231, 1
          %s2779 = scalar_lea.sflag [#allocation9], %s2778
          %s2780 = sand.u32 %s231, 1
          %s2781 = smul.addr %s2780, 16
          %s2782 = scalar_lea.vmem [#allocation12], %s2781
          %2783 = dma.done %s2779, 256
        $region80: #{tpu_custom_call.1} parent=75 // pred_fallthru
          _
      $region76: #{tpu_custom_call.1} parent=5 // pred_fallthru
        _
    $region6: #{tpu_custom_call.1} parent=1 // loop_footer
      %s29 = sadd.s32 1, %s25
    $region7: #{tpu_custom_call.1} parent=1 // loop_footer_branch
      %24 = sbr.rel target = $region3
    $region8: #{tpu_custom_call.1} parent=1 // loop_exit
      _
    %2784 = vsyncpa [#allocation8], 1
    %s2785 = scalar_lea.sflag [#allocation8], 1
    %2786 = vsyncpa %s2785, 1
    %2787 = vsyncpa [#allocation11], 1
    %s2788 = scalar_lea.sflag [#allocation11], 1
    %2789 = vsyncpa %s2788, 1
    %2790 = vsyncpa [#allocation9], 1
    %s2791 = scalar_lea.sflag [#allocation9], 1
    %2792 = vsyncpa %s2791, 1

</llo_original>
